<compile_context>
chip_gen: v6e
topology: v6e:2x2x1
jax: 0.10.0
libtpu: 0.0.40
codegen_flags: <defaults>
</compile_context>

<pallas_src>
import functools
import math

import jax
import jax.numpy as jnp
from jax import lax
from jax.experimental import pallas as pl
from jax.experimental.pallas import tpu as pltpu


def mha_kernel(q_ref, k_ref, v_ref,
               wq_ref, bq_ref, wk_ref, bk_ref, wv_ref, bv_ref, wfc_ref,
               out_ref, attn_ref,
               kproj_scr, vproj_scr,
               *, scale, n_heads, attn_dim):
    lq = pl.program_id(1)
    cdt = kproj_scr.dtype                     # MXU-operand compute dtype
    dn_nt = (((1,), (1,)), ((), ()))          # contract last dims (x @ W^T)
    dn_nn = (((1,), (0,)), ((), ()))          # ordinary matmul

    # --- K/V projection: full D-wide matmuls, computed once per batch ------
    @pl.when(lq == 0)
    def _project_kv():
        xk = k_ref[0]                                              # [Lk, D]
        xv = v_ref[0]
        kproj = lax.dot_general(xk, wk_ref[...], dn_nt,
                                preferred_element_type=jnp.float32) + bk_ref[...]
        vproj = lax.dot_general(xv, wv_ref[...], dn_nt,
                                preferred_element_type=jnp.float32) + bv_ref[...]
        kproj_scr[...] = kproj.astype(cdt)                         # [Lk, D]
        vproj_scr[...] = vproj.astype(cdt)

    # --- Q projection for this Lq tile: full D-wide matmul ------------------
    xq = q_ref[0]                                                  # [Tq, D]
    qproj = lax.dot_general(xq, wq_ref[...], dn_nt,
                            preferred_element_type=jnp.float32) + bq_ref[...]
    qproj = qproj.astype(cdt)                                      # [Tq, D]

    kproj = kproj_scr[...]                                         # [Lk, D]
    vproj = vproj_scr[...]

    # --- per-head attention (unrolled; score matmuls are inherently A-deep) -
    ctx_parts = []
    for h in range(n_heads):
        sl = slice(h * attn_dim, (h + 1) * attn_dim)
        q_h = qproj[:, sl]                                         # [Tq, A]
        k_h = kproj[:, sl]                                         # [Lk, A]
        v_h = vproj[:, sl]                                         # [Lk, A]

        # score = Q_h K_h^T / sqrt(d_model); no transpose materialized.
        score = lax.dot_general(q_h, k_h, dn_nt,
                                preferred_element_type=jnp.float32) * scale
        # TODO(synk): optional `mask` argument (masked_fill -inf) not implemented.
        score = score - jnp.max(score, axis=-1, keepdims=True)
        p = jnp.exp(score)
        denom = jnp.sum(p, axis=-1, keepdims=True)
        attn = p * pl.reciprocal(denom, approx=True)               # [Tq, Lk] f32
        # TODO(synk): nn.Dropout(p=0.1) on attn omitted (inference/eval semantics).

        attn_ref[h, 0] = attn.astype(attn_ref.dtype)

        ctx_h = lax.dot_general(attn.astype(cdt), v_h, dn_nn,
                                preferred_element_type=jnp.float32)  # [Tq, A]
        ctx_parts.append(ctx_h.astype(cdt))

    # --- fused fc over the concatenated heads: single full D-deep matmul ----
    ctx = jnp.concatenate(ctx_parts, axis=-1)                      # [Tq, D]
    out = lax.dot_general(ctx, wfc_ref[...], dn_nt,
                          preferred_element_type=jnp.float32)      # [Tq, D]
    out_ref[0] = out.astype(out_ref.dtype)


def _pick_lq_tile(lq, max_tile=512):
    """Largest Lq tile <= max_tile that divides Lq and is a multiple of 8."""
    if lq <= max_tile:
        return lq
    for t in (512, 384, 256, 128, 64, 32, 16, 8):
        if lq % t == 0:
            return t
    return lq


def multi_head_attention_pallas(q, k, v, wq, bq, wk, bk, wv, bv, wfc,
                                *, compute_dtype=None):
    """q,k,v: [B, L, D].  wq/wk/wv: [H, A, D], bq/bk/bv: [H, A] (per-head
    nn.Linear weights/biases, A = D // H).  wfc: [D, D] (out, in), no bias.
    compute_dtype: dtype of the MXU operands (e.g. jnp.bfloat16 on v6e/v7x);
    accumulation and softmax stay in f32.
    Returns (context [B, Lq, D], attn [H, B, Lq, Lk])."""
    B, Lq, D = q.shape
    Lk = k.shape[1]
    H, A, _ = wq.shape
    assert H * A == D
    scale = 1.0 / math.sqrt(D)         # PyTorch module uses sqrt(d_model)

    out_dtype = q.dtype
    cdt = compute_dtype if compute_dtype is not None else q.dtype
    f32 = jnp.float32

    # MXU operands in compute dtype; biases stay f32 (added after f32 accum).
    qc = q.astype(cdt)
    kc = k.astype(cdt)
    vc = v.astype(cdt)
    # Pack per-head weights into one [D, D] slab; rows h*A:(h+1)*A = head h,
    # matching torch.cat(..., dim=-1) concatenation order for the fc input.
    wq2 = wq.reshape(D, D).astype(cdt)
    wk2 = wk.reshape(D, D).astype(cdt)
    wv2 = wv.reshape(D, D).astype(cdt)
    bq2 = bq.reshape(1, D).astype(f32)
    bk2 = bk.reshape(1, D).astype(f32)
    bv2 = bv.reshape(1, D).astype(f32)
    wfc2 = wfc.astype(cdt)             # [D_out, D_in]

    Tq = _pick_lq_tile(Lq)
    n_lq = Lq // Tq

    kernel = functools.partial(mha_kernel, scale=scale, n_heads=H, attn_dim=A)

    # Advisory cost estimate for XLA scheduling around the custom call.
    in_isize = qc.dtype.itemsize
    w_isize = wq2.dtype.itemsize
    out_isize = jnp.zeros((), out_dtype).dtype.itemsize
    flops = int(2 * B * (Lq + 2 * Lk) * D * D        # Q/K/V projections
                + 4 * B * Lq * Lk * D                # scores + attn @ V
                + 2 * B * Lq * D * D)                # fc
    bytes_accessed = int((B * Lq * D + 2 * B * Lk * D) * in_isize
                         + (4 * D * D) * w_isize + 3 * D * 4
                         + B * Lq * D * out_isize
                         + H * B * Lq * Lk * out_isize)
    cost = pl.CostEstimate(flops=flops,
                           transcendentals=int(B * H * Lq * Lk),
                           bytes_accessed=bytes_accessed)

    out, attn = pl.pallas_call(
        kernel,
        out_shape=(
            jax.ShapeDtypeStruct((B, Lq, D), out_dtype),
            jax.ShapeDtypeStruct((H, B, Lq, Lk), out_dtype),
        ),
        grid_spec=pltpu.PrefetchScalarGridSpec(
            num_scalar_prefetch=0,
            grid=(B, n_lq),                     # Lq tiles last: scratch K/V carry
            in_specs=[
                pl.BlockSpec((1, Tq, D), lambda b, i: (b, i, 0)),    # q tile
                pl.BlockSpec((1, Lk, D), lambda b, i: (b, 0, 0)),    # k (resident over i)
                pl.BlockSpec((1, Lk, D), lambda b, i: (b, 0, 0)),    # v (resident over i)
                pl.BlockSpec((D, D), lambda b, i: (0, 0)),           # Wq (all heads)
                pl.BlockSpec((1, D), lambda b, i: (0, 0)),           # bq
                pl.BlockSpec((D, D), lambda b, i: (0, 0)),           # Wk
                pl.BlockSpec((1, D), lambda b, i: (0, 0)),           # bk
                pl.BlockSpec((D, D), lambda b, i: (0, 0)),           # Wv
                pl.BlockSpec((1, D), lambda b, i: (0, 0)),           # bv
                pl.BlockSpec((D, D), lambda b, i: (0, 0)),           # Wfc
            ],
            out_specs=[
                pl.BlockSpec((1, Tq, D), lambda b, i: (b, i, 0)),          # context
                pl.BlockSpec((H, 1, Tq, Lk), lambda b, i: (0, b, i, 0)),   # attn maps
            ],
            scratch_shapes=[
                pltpu.VMEM((Lk, D), cdt),   # projected K (all heads), cached over Lq tiles
                pltpu.VMEM((Lk, D), cdt),   # projected V
            ],
        ),
        compiler_params=pltpu.CompilerParams(
            # batch is parallel (megacore); Lq tiles are sequential ("arbitrary")
            # because the projected-K/V scratch is carried across them.
            dimension_semantics=("parallel", "arbitrary"),
            vmem_limit_bytes=48 * 1024 * 1024,
        ),
        cost_estimate=cost,
    )(qc, kc, vc, wq2, bq2, wk2, bk2, wv2, bv2, wfc2)

    return out, attn


def multi_head_attention_reference(q, k, v, wq, bq, wk, bk, wv, bv, wfc):
    """Pure-JAX reference mirroring the PyTorch forward (dropout in eval mode)."""
    D = q.shape[-1]
    H = wq.shape[0]
    scale = 1.0 / math.sqrt(D)
    contexts, attns = [], []
    for h in range(H):
        qh = q @ wq[h].T + bq[h]                               # [B, Lq, A]
        kh = k @ wk[h].T + bk[h]                               # [B, Lk, A]
        vh = v @ wv[h].T + bv[h]                               # [B, Lk, A]
        score = jnp.einsum('bqa,bka->bqk', qh, kh) * scale     # [B, Lq, Lk]
        attn = jax.nn.softmax(score, axis=-1)
        ctx = jnp.einsum('bqk,bka->bqa', attn, vh)             # [B, Lq, A]
        contexts.append(ctx)
        attns.append(attn)
    concat = jnp.concatenate(contexts, axis=-1)                # [B, Lq, D]
    out = concat @ wfc.T                                       # fc, no bias
    return out, jnp.stack(attns, axis=0)


if __name__ == "__main__":
    # Small shapes consistent with the module: d_model divisible by n_heads.
    # (For perf tuning use lane-aligned shapes: D, Lk multiples of 128, Lq tile
    #  multiples of 8; the toy shapes here are for correctness only.)
    B, L, D, H = 2, 8, 32, 4
    A = D // H

    key = jax.random.PRNGKey(0)
    ks = jax.random.split(key, 10)
    q = jax.random.normal(ks[0], (B, L, D), jnp.float32)
    k = jax.random.normal(ks[1], (B, L, D), jnp.float32)
    v = jax.random.normal(ks[2], (B, L, D), jnp.float32)

    # Per-head Linear weights [out=A, in=D] and biases [A].
    wq = jax.random.normal(ks[3], (H, A, D), jnp.float32) * 0.1
    bq = jax.random.normal(ks[4], (H, A), jnp.float32) * 0.1
    wk = jax.random.normal(ks[5], (H, A, D), jnp.float32) * 0.1
    bk = jax.random.normal(ks[6], (H, A), jnp.float32) * 0.1
    wv = jax.random.normal(ks[7], (H, A, D), jnp.float32) * 0.1
    bv = jax.random.normal(ks[8], (H, A), jnp.float32) * 0.1
    # Final projection fc: Linear(D, D, bias=False) -> weight [D, D].
    wfc = jax.random.normal(ks[9], (D, D), jnp.float32) * 0.1

    out_r, attn_r = multi_head_attention_reference(
        q, k, v, wq, bq, wk, bk, wv, bv, wfc)

    # f32 path (tight check; approx reciprocal => ~1e-3 tolerance).
    out, attn = multi_head_attention_pallas(q, k, v, wq, bq, wk, bk, wv, bv, wfc)
    jax.block_until_ready(out)
    jax.block_until_ready(attn)
    assert jnp.allclose(out, out_r, atol=2e-3, rtol=2e-3), "context mismatch (f32)"
    assert jnp.allclose(attn, attn_r, atol=2e-3, rtol=2e-3), "attn mismatch (f32)"

    # bf16 MXU-operand path (the perf configuration for v6e/v7x); loose check.
    out_bf, attn_bf = multi_head_attention_pallas(
        q, k, v, wq, bq, wk, bk, wv, bv, wfc, compute_dtype=jnp.bfloat16)
    jax.block_until_ready(out_bf)
    jax.block_until_ready(attn_bf)
    assert jnp.allclose(out_bf, out_r, atol=1e-1, rtol=1e-1), "context mismatch (bf16)"

    print("KERNEL_OK")
</pallas_src>

<mosaic_0001>
module attributes {stable_mosaic.version = 11 : i64} {
  func.func @mha_kernel(%arg0: i32, %arg1: i32, %arg2: memref<1x8x32xf32, #tpu.memory_space<vmem>>, %arg3: memref<1x8x32xf32, #tpu.memory_space<vmem>>, %arg4: memref<1x8x32xf32, #tpu.memory_space<vmem>>, %arg5: memref<32x32xf32, #tpu.memory_space<vmem>>, %arg6: memref<1x32xf32, #tpu.memory_space<vmem>>, %arg7: memref<32x32xf32, #tpu.memory_space<vmem>>, %arg8: memref<1x32xf32, #tpu.memory_space<vmem>>, %arg9: memref<32x32xf32, #tpu.memory_space<vmem>>, %arg10: memref<1x32xf32, #tpu.memory_space<vmem>>, %arg11: memref<32x32xf32, #tpu.memory_space<vmem>>, %arg12: memref<1x8x32xf32, #tpu.memory_space<vmem>>, %arg13: memref<4x1x8x8xf32, #tpu.memory_space<vmem>>, %arg14: memref<8x32xf32, #tpu.memory_space<vmem>>, %arg15: memref<8x32xf32, #tpu.memory_space<vmem>>) attributes {dimension_semantics = [#tpu.dimension_semantics<parallel>, #tpu.dimension_semantics<arbitrary>], iteration_bounds = array<i64: 2, 1>, scalar_prefetch = 0 : i64, scratch_operands = 2 : i64, tpu.core_type = #tpu.core_type<tc>, window_params = [{transform_indices = @transform_0, window_bounds = array<i64: 1, 8, 32>}, {transform_indices = @transform_1, window_bounds = array<i64: 1, 8, 32>}, {transform_indices = @transform_2, window_bounds = array<i64: 1, 8, 32>}, {pipeline_mode = #tpu.pipeline_mode<synchronous>, transform_indices = @transform_3, window_bounds = array<i64: 32, 32>}, {pipeline_mode = #tpu.pipeline_mode<synchronous>, transform_indices = @transform_4, window_bounds = array<i64: 1, 32>}, {pipeline_mode = #tpu.pipeline_mode<synchronous>, transform_indices = @transform_5, window_bounds = array<i64: 32, 32>}, {pipeline_mode = #tpu.pipeline_mode<synchronous>, transform_indices = @transform_6, window_bounds = array<i64: 1, 32>}, {pipeline_mode = #tpu.pipeline_mode<synchronous>, transform_indices = @transform_7, window_bounds = array<i64: 32, 32>}, {pipeline_mode = #tpu.pipeline_mode<synchronous>, transform_indices = @transform_8, window_bounds = array<i64: 1, 32>}, {pipeline_mode = #tpu.pipeline_mode<synchronous>, transform_indices = @transform_9, window_bounds = array<i64: 32, 32>}, {transform_indices = @transform_10, window_bounds = array<i64: 1, 8, 32>}, {transform_indices = @transform_11, window_bounds = array<i64: 4, 1, 8, 8>}]} {
    %c0_i32 = arith.constant 0 : i32
    %0 = arith.cmpi eq, %arg1, %c0_i32 : i32
    %1 = arith.extui %0 : i1 to i32
    %c0_i32_0 = arith.constant 0 : i32
    %2 = arith.cmpi ne, %1, %c0_i32_0 : i32
    scf.if %2 {
      %c0_50 = arith.constant 0 : index
      %c0_51 = arith.constant 0 : index
      %c0_52 = arith.constant 0 : index
      %98 = vector.load %arg3[%c0_50, %c0_51, %c0_52] : memref<1x8x32xf32, #tpu.memory_space<vmem>>, vector<1x8x32xf32>
      %99 = vector.shape_cast %98 : vector<1x8x32xf32> to vector<8x32xf32>
      %c0_53 = arith.constant 0 : index
      %c0_54 = arith.constant 0 : index
      %c0_55 = arith.constant 0 : index
      %100 = vector.load %arg4[%c0_53, %c0_54, %c0_55] : memref<1x8x32xf32, #tpu.memory_space<vmem>>, vector<1x8x32xf32>
      %101 = vector.shape_cast %100 : vector<1x8x32xf32> to vector<8x32xf32>
      %c0_56 = arith.constant 0 : index
      %c0_57 = arith.constant 0 : index
      %102 = vector.load %arg7[%c0_56, %c0_57] : memref<32x32xf32, #tpu.memory_space<vmem>>, vector<32x32xf32>
      %cst_58 = arith.constant dense<0.000000e+00> : vector<8x32xf32>
      %103 = tpu.matmul %99, %102, %cst_58 {dimension_numbers = #tpu.dot_dimension_numbers<[1], [1], [0], [0], [0, 0, 1, 0], [], []>} : vector<8x32xf32>, vector<32x32xf32>, vector<8x32xf32> -> vector<8x32xf32>
      %c0_59 = arith.constant 0 : index
      %c0_60 = arith.constant 0 : index
      %104 = vector.load %arg8[%c0_59, %c0_60] : memref<1x32xf32, #tpu.memory_space<vmem>>, vector<1x32xf32>
      %105 = vector.broadcast %104 : vector<1x32xf32> to vector<8x32xf32>
      %106 = arith.addf %103, %105 : vector<8x32xf32>
      %c0_61 = arith.constant 0 : index
      %c0_62 = arith.constant 0 : index
      %107 = vector.load %arg9[%c0_61, %c0_62] : memref<32x32xf32, #tpu.memory_space<vmem>>, vector<32x32xf32>
      %cst_63 = arith.constant dense<0.000000e+00> : vector<8x32xf32>
      %108 = tpu.matmul %101, %107, %cst_63 {dimension_numbers = #tpu.dot_dimension_numbers<[1], [1], [0], [0], [0, 0, 1, 0], [], []>} : vector<8x32xf32>, vector<32x32xf32>, vector<8x32xf32> -> vector<8x32xf32>
      %c0_64 = arith.constant 0 : index
      %c0_65 = arith.constant 0 : index
      %109 = vector.load %arg10[%c0_64, %c0_65] : memref<1x32xf32, #tpu.memory_space<vmem>>, vector<1x32xf32>
      %110 = vector.broadcast %109 : vector<1x32xf32> to vector<8x32xf32>
      %111 = arith.addf %108, %110 : vector<8x32xf32>
      %c0_66 = arith.constant 0 : index
      %c0_67 = arith.constant 0 : index
      %112 = vector.load %arg14[%c0_66, %c0_67] : memref<8x32xf32, #tpu.memory_space<vmem>>, vector<8x32xf32>
      tpu.vector_store %arg14[%c0_66, %c0_67], %106 {strides = array<i32>} : memref<8x32xf32, #tpu.memory_space<vmem>>, vector<8x32xf32>,
      %c0_68 = arith.constant 0 : index
      %c0_69 = arith.constant 0 : index
      %113 = vector.load %arg15[%c0_68, %c0_69] : memref<8x32xf32, #tpu.memory_space<vmem>>, vector<8x32xf32>
      tpu.vector_store %arg15[%c0_68, %c0_69], %111 {strides = array<i32>} : memref<8x32xf32, #tpu.memory_space<vmem>>, vector<8x32xf32>,
    } else {
    }
    %c0 = arith.constant 0 : index
    %c0_1 = arith.constant 0 : index
    %c0_2 = arith.constant 0 : index
    %3 = vector.load %arg2[%c0, %c0_1, %c0_2] : memref<1x8x32xf32, #tpu.memory_space<vmem>>, vector<1x8x32xf32>
    %4 = vector.shape_cast %3 : vector<1x8x32xf32> to vector<8x32xf32>
    %c0_3 = arith.constant 0 : index
    %c0_4 = arith.constant 0 : index
    %5 = vector.load %arg5[%c0_3, %c0_4] : memref<32x32xf32, #tpu.memory_space<vmem>>, vector<32x32xf32>
    %cst = arith.constant dense<0.000000e+00> : vector<8x32xf32>
    %6 = tpu.matmul %4, %5, %cst {dimension_numbers = #tpu.dot_dimension_numbers<[1], [1], [0], [0], [0, 0, 1, 0], [], []>} : vector<8x32xf32>, vector<32x32xf32>, vector<8x32xf32> -> vector<8x32xf32>
    %c0_5 = arith.constant 0 : index
    %c0_6 = arith.constant 0 : index
    %7 = vector.load %arg6[%c0_5, %c0_6] : memref<1x32xf32, #tpu.memory_space<vmem>>, vector<1x32xf32>
    %8 = vector.broadcast %7 : vector<1x32xf32> to vector<8x32xf32>
    %9 = arith.addf %6, %8 : vector<8x32xf32>
    %c0_7 = arith.constant 0 : index
    %c0_8 = arith.constant 0 : index
    %10 = vector.load %arg14[%c0_7, %c0_8] : memref<8x32xf32, #tpu.memory_space<vmem>>, vector<8x32xf32>
    %c0_9 = arith.constant 0 : index
    %c0_10 = arith.constant 0 : index
    %11 = vector.load %arg15[%c0_9, %c0_10] : memref<8x32xf32, #tpu.memory_space<vmem>>, vector<8x32xf32>
    %12 = vector.extract_strided_slice %9 {offsets = [0, 0], sizes = [8, 8], strides = [1, 1]} : vector<8x32xf32> to vector<8x8xf32>
    %13 = vector.extract_strided_slice %10 {offsets = [0, 0], sizes = [8, 8], strides = [1, 1]} : vector<8x32xf32> to vector<8x8xf32>
    %14 = vector.extract_strided_slice %11 {offsets = [0, 0], sizes = [8, 8], strides = [1, 1]} : vector<8x32xf32> to vector<8x8xf32>
    %cst_11 = arith.constant dense<0.000000e+00> : vector<8x8xf32>
    %15 = tpu.matmul %12, %13, %cst_11 {dimension_numbers = #tpu.dot_dimension_numbers<[1], [1], [0], [0], [0, 0, 1, 0], [], []>} : vector<8x8xf32>, vector<8x8xf32>, vector<8x8xf32> -> vector<8x8xf32>
    %cst_12 = arith.constant 0.176776692 : f32
    %16 = vector.broadcast %cst_12 : f32 to vector<8x8xf32>
    %17 = arith.mulf %15, %16 : vector<8x8xf32>
    %cst_13 = arith.constant dense<0xFF800000> : vector<8xf32>
    %18 = vector.multi_reduction <maximumf>, %17, %cst_13 [1] : vector<8x8xf32> to vector<8xf32>
    %19 = vector.shape_cast %18 : vector<8xf32> to vector<8x1xf32>
    %20 = vector.broadcast %19 : vector<8x1xf32> to vector<8x8xf32>
    %21 = arith.subf %17, %20 : vector<8x8xf32>
    %22 = math.exp %21 : vector<8x8xf32>
    %cst_14 = arith.constant dense<0.000000e+00> : vector<8xf32>
    %23 = vector.multi_reduction <add>, %22, %cst_14 [1] : vector<8x8xf32> to vector<8xf32>
    %24 = vector.shape_cast %23 : vector<8xf32> to vector<8x1xf32>
    %25 = tpu.reciprocal %24 {approx = true} : vector<8x1xf32> -> vector<8x1xf32>
    %26 = vector.broadcast %25 : vector<8x1xf32> to vector<8x8xf32>
    %27 = arith.mulf %22, %26 : vector<8x8xf32>
    %c0_15 = arith.constant 0 : index
    %c0_16 = arith.constant 0 : index
    %c0_17 = arith.constant 0 : index
    %c0_18 = arith.constant 0 : index
    %28 = vector.load %arg13[%c0_15, %c0_16, %c0_17, %c0_18] : memref<4x1x8x8xf32, #tpu.memory_space<vmem>>, vector<1x1x8x8xf32>
    %29 = vector.shape_cast %28 : vector<1x1x8x8xf32> to vector<8x8xf32>
    %30 = vector.shape_cast %27 : vector<8x8xf32> to vector<1x1x8x8xf32>
    tpu.vector_store %arg13[%c0_15, %c0_16, %c0_17, %c0_18], %30 {strides = array<i32>} : memref<4x1x8x8xf32, #tpu.memory_space<vmem>>, vector<1x1x8x8xf32>,
    %cst_19 = arith.constant dense<0.000000e+00> : vector<8x8xf32>
    %31 = tpu.matmul %27, %14, %cst_19 {dimension_numbers = #tpu.dot_dimension_numbers<[1], [0], [0], [1], [0, 0, 1, 1], [], []>} : vector<8x8xf32>, vector<8x8xf32>, vector<8x8xf32> -> vector<8x8xf32>
    %32 = vector.extract_strided_slice %9 {offsets = [0, 8], sizes = [8, 8], strides = [1, 1]} : vector<8x32xf32> to vector<8x8xf32>
    %33 = vector.extract_strided_slice %10 {offsets = [0, 8], sizes = [8, 8], strides = [1, 1]} : vector<8x32xf32> to vector<8x8xf32>
    %34 = vector.extract_strided_slice %11 {offsets = [0, 8], sizes = [8, 8], strides = [1, 1]} : vector<8x32xf32> to vector<8x8xf32>
    %cst_20 = arith.constant dense<0.000000e+00> : vector<8x8xf32>
    %35 = tpu.matmul %32, %33, %cst_20 {dimension_numbers = #tpu.dot_dimension_numbers<[1], [1], [0], [0], [0, 0, 1, 0], [], []>} : vector<8x8xf32>, vector<8x8xf32>, vector<8x8xf32> -> vector<8x8xf32>
    %cst_21 = arith.constant 0.176776692 : f32
    %36 = vector.broadcast %cst_21 : f32 to vector<8x8xf32>
    %37 = arith.mulf %35, %36 : vector<8x8xf32>
    %cst_22 = arith.constant dense<0xFF800000> : vector<8xf32>
    %38 = vector.multi_reduction <maximumf>, %37, %cst_22 [1] : vector<8x8xf32> to vector<8xf32>
    %39 = vector.shape_cast %38 : vector<8xf32> to vector<8x1xf32>
    %40 = vector.broadcast %39 : vector<8x1xf32> to vector<8x8xf32>
    %41 = arith.subf %37, %40 : vector<8x8xf32>
    %42 = math.exp %41 : vector<8x8xf32>
    %cst_23 = arith.constant dense<0.000000e+00> : vector<8xf32>
    %43 = vector.multi_reduction <add>, %42, %cst_23 [1] : vector<8x8xf32> to vector<8xf32>
    %44 = vector.shape_cast %43 : vector<8xf32> to vector<8x1xf32>
    %45 = tpu.reciprocal %44 {approx = true} : vector<8x1xf32> -> vector<8x1xf32>
    %46 = vector.broadcast %45 : vector<8x1xf32> to vector<8x8xf32>
    %47 = arith.mulf %42, %46 : vector<8x8xf32>
    %c1 = arith.constant 1 : index
    %c0_24 = arith.constant 0 : index
    %c0_25 = arith.constant 0 : index
    %c0_26 = arith.constant 0 : index
    %48 = vector.load %arg13[%c1, %c0_24, %c0_25, %c0_26] : memref<4x1x8x8xf32, #tpu.memory_space<vmem>>, vector<1x1x8x8xf32>
    %49 = vector.shape_cast %48 : vector<1x1x8x8xf32> to vector<8x8xf32>
    %50 = vector.shape_cast %47 : vector<8x8xf32> to vector<1x1x8x8xf32>
    tpu.vector_store %arg13[%c1, %c0_24, %c0_25, %c0_26], %50 {strides = array<i32>} : memref<4x1x8x8xf32, #tpu.memory_space<vmem>>, vector<1x1x8x8xf32>,
    %cst_27 = arith.constant dense<0.000000e+00> : vector<8x8xf32>
    %51 = tpu.matmul %47, %34, %cst_27 {dimension_numbers = #tpu.dot_dimension_numbers<[1], [0], [0], [1], [0, 0, 1, 1], [], []>} : vector<8x8xf32>, vector<8x8xf32>, vector<8x8xf32> -> vector<8x8xf32>
    %52 = vector.extract_strided_slice %9 {offsets = [0, 16], sizes = [8, 8], strides = [1, 1]} : vector<8x32xf32> to vector<8x8xf32>
    %53 = vector.extract_strided_slice %10 {offsets = [0, 16], sizes = [8, 8], strides = [1, 1]} : vector<8x32xf32> to vector<8x8xf32>
    %54 = vector.extract_strided_slice %11 {offsets = [0, 16], sizes = [8, 8], strides = [1, 1]} : vector<8x32xf32> to vector<8x8xf32>
    %cst_28 = arith.constant dense<0.000000e+00> : vector<8x8xf32>
    %55 = tpu.matmul %52, %53, %cst_28 {dimension_numbers = #tpu.dot_dimension_numbers<[1], [1], [0], [0], [0, 0, 1, 0], [], []>} : vector<8x8xf32>, vector<8x8xf32>, vector<8x8xf32> -> vector<8x8xf32>
    %cst_29 = arith.constant 0.176776692 : f32
    %56 = vector.broadcast %cst_29 : f32 to vector<8x8xf32>
    %57 = arith.mulf %55, %56 : vector<8x8xf32>
    %cst_30 = arith.constant dense<0xFF800000> : vector<8xf32>
    %58 = vector.multi_reduction <maximumf>, %57, %cst_30 [1] : vector<8x8xf32> to vector<8xf32>
    %59 = vector.shape_cast %58 : vector<8xf32> to vector<8x1xf32>
    %60 = vector.broadcast %59 : vector<8x1xf32> to vector<8x8xf32>
    %61 = arith.subf %57, %60 : vector<8x8xf32>
    %62 = math.exp %61 : vector<8x8xf32>
    %cst_31 = arith.constant dense<0.000000e+00> : vector<8xf32>
    %63 = vector.multi_reduction <add>, %62, %cst_31 [1] : vector<8x8xf32> to vector<8xf32>
    %64 = vector.shape_cast %63 : vector<8xf32> to vector<8x1xf32>
    %65 = tpu.reciprocal %64 {approx = true} : vector<8x1xf32> -> vector<8x1xf32>
    %66 = vector.broadcast %65 : vector<8x1xf32> to vector<8x8xf32>
    %67 = arith.mulf %62, %66 : vector<8x8xf32>
    %c2 = arith.constant 2 : index
    %c0_32 = arith.constant 0 : index
    %c0_33 = arith.constant 0 : index
    %c0_34 = arith.constant 0 : index
    %68 = vector.load %arg13[%c2, %c0_32, %c0_33, %c0_34] : memref<4x1x8x8xf32, #tpu.memory_space<vmem>>, vector<1x1x8x8xf32>
    %69 = vector.shape_cast %68 : vector<1x1x8x8xf32> to vector<8x8xf32>
    %70 = vector.shape_cast %67 : vector<8x8xf32> to vector<1x1x8x8xf32>
    tpu.vector_store %arg13[%c2, %c0_32, %c0_33, %c0_34], %70 {strides = array<i32>} : memref<4x1x8x8xf32, #tpu.memory_space<vmem>>, vector<1x1x8x8xf32>,
    %cst_35 = arith.constant dense<0.000000e+00> : vector<8x8xf32>
    %71 = tpu.matmul %67, %54, %cst_35 {dimension_numbers = #tpu.dot_dimension_numbers<[1], [0], [0], [1], [0, 0, 1, 1], [], []>} : vector<8x8xf32>, vector<8x8xf32>, vector<8x8xf32> -> vector<8x8xf32>
    %72 = vector.extract_strided_slice %9 {offsets = [0, 24], sizes = [8, 8], strides = [1, 1]} : vector<8x32xf32> to vector<8x8xf32>
    %73 = vector.extract_strided_slice %10 {offsets = [0, 24], sizes = [8, 8], strides = [1, 1]} : vector<8x32xf32> to vector<8x8xf32>
    %74 = vector.extract_strided_slice %11 {offsets = [0, 24], sizes = [8, 8], strides = [1, 1]} : vector<8x32xf32> to vector<8x8xf32>
    %cst_36 = arith.constant dense<0.000000e+00> : vector<8x8xf32>
    %75 = tpu.matmul %72, %73, %cst_36 {dimension_numbers = #tpu.dot_dimension_numbers<[1], [1], [0], [0], [0, 0, 1, 0], [], []>} : vector<8x8xf32>, vector<8x8xf32>, vector<8x8xf32> -> vector<8x8xf32>
    %cst_37 = arith.constant 0.176776692 : f32
    %76 = vector.broadcast %cst_37 : f32 to vector<8x8xf32>
    %77 = arith.mulf %75, %76 : vector<8x8xf32>
    %cst_38 = arith.constant dense<0xFF800000> : vector<8xf32>
    %78 = vector.multi_reduction <maximumf>, %77, %cst_38 [1] : vector<8x8xf32> to vector<8xf32>
    %79 = vector.shape_cast %78 : vector<8xf32> to vector<8x1xf32>
    %80 = vector.broadcast %79 : vector<8x1xf32> to vector<8x8xf32>
    %81 = arith.subf %77, %80 : vector<8x8xf32>
    %82 = math.exp %81 : vector<8x8xf32>
    %cst_39 = arith.constant dense<0.000000e+00> : vector<8xf32>
    %83 = vector.multi_reduction <add>, %82, %cst_39 [1] : vector<8x8xf32> to vector<8xf32>
    %84 = vector.shape_cast %83 : vector<8xf32> to vector<8x1xf32>
    %85 = tpu.reciprocal %84 {approx = true} : vector<8x1xf32> -> vector<8x1xf32>
    %86 = vector.broadcast %85 : vector<8x1xf32> to vector<8x8xf32>
    %87 = arith.mulf %82, %86 : vector<8x8xf32>
    %c3 = arith.constant 3 : index
    %c0_40 = arith.constant 0 : index
    %c0_41 = arith.constant 0 : index
    %c0_42 = arith.constant 0 : index
    %88 = vector.load %arg13[%c3, %c0_40, %c0_41, %c0_42] : memref<4x1x8x8xf32, #tpu.memory_space<vmem>>, vector<1x1x8x8xf32>
    %89 = vector.shape_cast %88 : vector<1x1x8x8xf32> to vector<8x8xf32>
    %90 = vector.shape_cast %87 : vector<8x8xf32> to vector<1x1x8x8xf32>
    tpu.vector_store %arg13[%c3, %c0_40, %c0_41, %c0_42], %90 {strides = array<i32>} : memref<4x1x8x8xf32, #tpu.memory_space<vmem>>, vector<1x1x8x8xf32>,
    %cst_43 = arith.constant dense<0.000000e+00> : vector<8x8xf32>
    %91 = tpu.matmul %87, %74, %cst_43 {dimension_numbers = #tpu.dot_dimension_numbers<[1], [0], [0], [1], [0, 0, 1, 1], [], []>} : vector<8x8xf32>, vector<8x8xf32>, vector<8x8xf32> -> vector<8x8xf32>
    %92 = tpu.concatenate %31, %51, %71, %91 in 1 : vector<8x8xf32>, vector<8x8xf32>, vector<8x8xf32>, vector<8x8xf32> -> vector<8x32xf32>
    %c0_44 = arith.constant 0 : index
    %c0_45 = arith.constant 0 : index
    %93 = vector.load %arg11[%c0_44, %c0_45] : memref<32x32xf32, #tpu.memory_space<vmem>>, vector<32x32xf32>
    %cst_46 = arith.constant dense<0.000000e+00> : vector<8x32xf32>
    %94 = tpu.matmul %92, %93, %cst_46 {dimension_numbers = #tpu.dot_dimension_numbers<[1], [1], [0], [0], [0, 0, 1, 0], [], []>} : vector<8x32xf32>, vector<32x32xf32>, vector<8x32xf32> -> vector<8x32xf32>
    %c0_47 = arith.constant 0 : index
    %c0_48 = arith.constant 0 : index
    %c0_49 = arith.constant 0 : index
    %95 = vector.load %arg12[%c0_47, %c0_48, %c0_49] : memref<1x8x32xf32, #tpu.memory_space<vmem>>, vector<1x8x32xf32>
    %96 = vector.shape_cast %95 : vector<1x8x32xf32> to vector<8x32xf32>
    %97 = vector.shape_cast %94 : vector<8x32xf32> to vector<1x8x32xf32>
    tpu.vector_store %arg12[%c0_47, %c0_48, %c0_49], %97 {strides = array<i32>} : memref<1x8x32xf32, #tpu.memory_space<vmem>>, vector<1x8x32xf32>,
    return
  }
  func.func @transform_0(%arg0: i32, %arg1: i32) -> (i32, i32, i32) {
    %c0_i32 = arith.constant 0 : i32
    %c0_i32_0 = arith.constant 0 : i32
    return %arg0, %arg1, %c0_i32 : i32, i32, i32
  }
  func.func @transform_1(%arg0: i32, %arg1: i32) -> (i32, i32, i32) {
    %c0_i32 = arith.constant 0 : i32
    %c0_i32_0 = arith.constant 0 : i32
    %c0_i32_1 = arith.constant 0 : i32
    return %arg0, %c0_i32, %c0_i32_0 : i32, i32, i32
  }
  func.func @transform_2(%arg0: i32, %arg1: i32) -> (i32, i32, i32) {
    %c0_i32 = arith.constant 0 : i32
    %c0_i32_0 = arith.constant 0 : i32
    %c0_i32_1 = arith.constant 0 : i32
    return %arg0, %c0_i32, %c0_i32_0 : i32, i32, i32
  }
  func.func @transform_3(%arg0: i32, %arg1: i32) -> (i32, i32) {
    %c0_i32 = arith.constant 0 : i32
    %c0_i32_0 = arith.constant 0 : i32
    %c0_i32_1 = arith.constant 0 : i32
    return %c0_i32, %c0_i32_0 : i32, i32
  }
  func.func @transform_4(%arg0: i32, %arg1: i32) -> (i32, i32) {
    %c0_i32 = arith.constant 0 : i32
    %c0_i32_0 = arith.constant 0 : i32
    %c0_i32_1 = arith.constant 0 : i32
    return %c0_i32, %c0_i32_0 : i32, i32
  }
  func.func @transform_5(%arg0: i32, %arg1: i32) -> (i32, i32) {
    %c0_i32 = arith.constant 0 : i32
    %c0_i32_0 = arith.constant 0 : i32
    %c0_i32_1 = arith.constant 0 : i32
    return %c0_i32, %c0_i32_0 : i32, i32
  }
  func.func @transform_6(%arg0: i32, %arg1: i32) -> (i32, i32) {
    %c0_i32 = arith.constant 0 : i32
    %c0_i32_0 = arith.constant 0 : i32
    %c0_i32_1 = arith.constant 0 : i32
    return %c0_i32, %c0_i32_0 : i32, i32
  }
  func.func @transform_7(%arg0: i32, %arg1: i32) -> (i32, i32) {
    %c0_i32 = arith.constant 0 : i32
    %c0_i32_0 = arith.constant 0 : i32
    %c0_i32_1 = arith.constant 0 : i32
    return %c0_i32, %c0_i32_0 : i32, i32
  }
  func.func @transform_8(%arg0: i32, %arg1: i32) -> (i32, i32) {
    %c0_i32 = arith.constant 0 : i32
    %c0_i32_0 = arith.constant 0 : i32
    %c0_i32_1 = arith.constant 0 : i32
    return %c0_i32, %c0_i32_0 : i32, i32
  }
  func.func @transform_9(%arg0: i32, %arg1: i32) -> (i32, i32) {
    %c0_i32 = arith.constant 0 : i32
    %c0_i32_0 = arith.constant 0 : i32
    %c0_i32_1 = arith.constant 0 : i32
    return %c0_i32, %c0_i32_0 : i32, i32
  }
  func.func @transform_10(%arg0: i32, %arg1: i32) -> (i32, i32, i32) {
    %c0_i32 = arith.constant 0 : i32
    %c0_i32_0 = arith.constant 0 : i32
    return %arg0, %arg1, %c0_i32 : i32, i32, i32
  }
  func.func @transform_11(%arg0: i32, %arg1: i32) -> (i32, i32, i32, i32) {
    %c0_i32 = arith.constant 0 : i32
    %c0_i32_0 = arith.constant 0 : i32
    %c0_i32_1 = arith.constant 0 : i32
    return %c0_i32, %arg0, %arg1, %c0_i32_0 : i32, i32, i32, i32
  }
}

</mosaic_0001>

<llo_original>
// kernel: tpu_custom_call.1
$region0: #{tpu_custom_call.1}
  #allocation0 [shape = 'u32[]', space=smem, size = 0x4, offset = 0x4, fixed_abs, tag = 'smem constant byte address 0x4 - core index']
  #allocation1 [shape = 'u32[144,128]{1,0:T(1,128)}', space=vmem, size = 0x12000, scoped, tag = 'internal scratch']
  #allocation2 [shape = 'f32[8,32]{1,0:T(8,128)}', space=vmem, size = 0x1000, scoped, tag = 'scratch operand']
  #allocation3 [shape = 'f32[8,32]{1,0:T(8,128)}', space=vmem, size = 0x1000, scoped, tag = 'scratch operand']
  %s0 = inlined_call_operand.hbm [shape: f32[2,8,32], index: 0, kind: input, shape index: {}]
  %s1 = inlined_call_operand.hbm [shape: f32[2,8,32], index: 1, kind: input, shape index: {}]
  %s2 = inlined_call_operand.hbm [shape: f32[2,8,32], index: 2, kind: input, shape index: {}]
  %s3 = inlined_call_operand.hbm [shape: f32[32,32], index: 3, kind: input, shape index: {}]
  %s4 = inlined_call_operand.vmem [shape: f32[1,32], index: 4, kind: input, shape index: {}]
  %s5 = inlined_call_operand.hbm [shape: f32[32,32], index: 5, kind: input, shape index: {}]
  %s6 = inlined_call_operand.vmem [shape: f32[1,32], index: 6, kind: input, shape index: {}]
  %s7 = inlined_call_operand.hbm [shape: f32[32,32], index: 7, kind: input, shape index: {}]
  %s8 = inlined_call_operand.vmem [shape: f32[1,32], index: 8, kind: input, shape index: {}]
  %s9 = inlined_call_operand.hbm [shape: f32[32,32], index: 9, kind: input, shape index: {}]
  %s10 = inlined_call_operand.hbm [shape: f32[2,8,32], index: 10, kind: output, shape index: {0}]
  %s11 = inlined_call_operand.hbm [shape: f32[4,2,8,8], index: 11, kind: output, shape index: {1}]
  %12 = xla_tuple %s10, %s11
  %s13 = sld [smem:[#allocation0]]
  $region113: #{tpu_custom_call.1} parent=0
    _
  %s15 = ssub.s32 1, %s13
  %s16 = scalar_select 0, %s15, %s13
  $region1: #{tpu_custom_call.1} parent=0
    #allocation4 [shape = 'u8[8192]{0}', space=vmem, size = 0x2000, scoped, tag = 'input window, operand 0']
    #allocation5 [shape = 's32[2]{0}', space=sflag, size = 0x8, scoped, tag = 'scoped memory for tpu_custom_call.1']
    #allocation6 [shape = 's32[2]{0}', space=sflag, size = 0x8, scoped, tag = 'scoped memory for tpu_custom_call.1']
    #allocation7 [shape = 'u8[8192]{0}', space=vmem, size = 0x2000, scoped, tag = 'input window, operand 1']
    #allocation8 [shape = 's32[2]{0}', space=sflag, size = 0x8, scoped, tag = 'scoped memory for tpu_custom_call.1']
    #allocation9 [shape = 'u8[8192]{0}', space=vmem, size = 0x2000, scoped, tag = 'input window, operand 2']
    #allocation10 [shape = 'u8[16384]{0}', space=vmem, size = 0x4000, scoped, tag = 'input window, operand 3, single buffered']
    #allocation11 [shape = 's32[1]{0}', space=sflag, size = 0x4, scoped, tag = 'scoped memory for tpu_custom_call.1']
    #allocation12 [shape = 'u8[16384]{0}', space=vmem, size = 0x4000, scoped, tag = 'input window, operand 5, single buffered']
    #allocation13 [shape = 'u8[16384]{0}', space=vmem, size = 0x4000, scoped, tag = 'input window, operand 7, single buffered']
    #allocation14 [shape = 's32[1]{0}', space=sflag, size = 0x4, scoped, tag = 'scoped memory for tpu_custom_call.1']
    #allocation15 [shape = 'u8[16384]{0}', space=vmem, size = 0x4000, scoped, tag = 'input window, operand 9, single buffered']
    #allocation16 [shape = 'u8[8192]{0}', space=vmem, size = 0x2000, scoped, tag = 'output window, operand 0']
    #allocation17 [shape = 'u8[32768]{0}', space=vmem, size = 0x8000, scoped, tag = 'output window, operand 1']
    #allocation18 [shape = 's32[2]{0}', space=sflag, size = 0x8, scoped, tag = 'scoped memory for tpu_custom_call.1']
    %17 = vsyncpa [#allocation5], 0
    %s18 = scalar_lea.sflag [#allocation5], 1
    %19 = vsyncpa %s18, 0
    %20 = vsyncpa [#allocation8], 0
    %s21 = scalar_lea.sflag [#allocation8], 1
    %22 = vsyncpa %s21, 0
    %23 = vsyncpa [#allocation11], 0
    %24 = vsyncpa [#allocation14], 0
    %25 = vsyncpa [#allocation6], 0
    %s26 = scalar_lea.sflag [#allocation6], 1
    %27 = vsyncpa %s26, 0
    %28 = vsyncpa [#allocation18], 0
    %s29 = scalar_lea.sflag [#allocation18], 1
    %30 = vsyncpa %s29, 0
    loop: start=0, step=1, limit=4
    $region2: #{tpu_custom_call.1} parent=1 // loop_pre_header
      _
    $region3: #{tpu_custom_call.1} parent=1 // loop_header
      %s32 = sphi 0, %s36
      %p33 = scmp.ge.s32.totalorder %s32, 4
      %s39 = sphi 0, %s51
      %s40 = sphi 0, %s47
      %s41 = sphi 0, %s39
      %s42 = sphi 0, %s40
      %s43 = sphi 0, %s41
      %s44 = sphi 0, %s42
      %s56 = sphi 0, %s58
      %s59 = sphi 0, %s56
      %s60 = sphi 0, %s59
      %s76 = sphi 0, %s60
      %s82 = sphi 0, %s84
      %s85 = sphi 0, %s82
      %s86 = sphi 0, %s85
      %s102 = sphi 0, %s86
      %s108 = sphi 0, %s110
      %s111 = sphi 0, %s108
      %s112 = sphi 0, %s111
      %s128 = sphi 0, %s112
      %s132 = sphi 0, %s132
      %s134 = sphi 0, %s132
      %s135 = sphi 0, %s134
      %s149 = sphi 0, %s135
      %s153 = sphi 0, %s153
      %s155 = sphi 0, %s153
      %s156 = sphi 0, %s155
      %s170 = sphi 0, %s156
      %s174 = sphi 0, %s174
      %s176 = sphi 0, %s174
      %s177 = sphi 0, %s176
      %s191 = sphi 0, %s177
      %s195 = sphi 0, %s195
      %s197 = sphi 0, %s195
      %s198 = sphi 0, %s197
      %s212 = sphi 0, %s198
      %s216 = sphi 0, %s216
      %s218 = sphi 0, %s216
      %s219 = sphi 0, %s218
      %s233 = sphi 0, %s219
      %s237 = sphi 0, %s237
      %s239 = sphi 0, %s237
      %s240 = sphi 0, %s239
      %s254 = sphi 0, %s240
      %s258 = sphi 0, %s258
      %s260 = sphi 0, %s258
      %s261 = sphi 0, %s260
      %s275 = sphi 0, %s261
      %s283 = sphi 0, %s285
      %s286 = sphi 0, %s283
      %s287 = sphi 0, %s286
      %s303 = sphi 0, %s287
      %s311 = sphi 0, %s313
      %s314 = sphi 0, %s311
      %s315 = sphi 0, %s314
      %s331 = sphi 0, %s315
    $region4: #{tpu_custom_call.1} parent=1 // loop_header_branch
      %35 = sbr.rel (%p33) target = $region8
    $region5: #{tpu_custom_call.1} parent=1 // loop_body
      %s37 = ssub.s32 %s32, 1
      %s38 = ssub.s32 %s32, 2
      %s45 = sadd.s32 1, %s40
      %p46 = scmp.ge.s32.totalorder %s45, 1
      %s47 = scalar_select %p46, 0, %s45
      %s48 = sadd.s32 1, %s39
      %s49 = scalar_select %p46, %s48, %s39
      %p50 = scmp.ge.s32.totalorder %s49, 2
      %s51 = scalar_select %p50, 0, %s49
      %s52 = ssub.s32 %s39, %s51
      %s53 = ssub.s32 %s40, %s47
      %s54 = sor.u32 %s52, %s53
      %p55 = scmp.eq.s32.totalorder %s54, 0
      %s57 = sadd.s32 %s56, 1
      %s58 = scalar_select %p55, %s56, %s57
      %p61 = pneg %p55
      %p62 = scmp.eq.s32.totalorder %s32, 1
      %p63 = por %p61, %p62
      %p64 = scmp.ne.s32.totalorder %s56, %s59
      %p65 = scmp.eq.s32.totalorder %s32, 0
      %p66 = por %p64, %p65
      %p67 = scmp.ne.s32.totalorder %s56, %s59
      %p68 = scmp.eq.s32.totalorder %s37, 1
      %p69 = por %p67, %p68
      %p70 = scmp.ne.s32.totalorder %s59, %s60
      %p71 = scmp.eq.s32.totalorder %s37, 0
      %p72 = por %p70, %p71
      %p73 = scmp.ne.s32.totalorder %s59, %s60
      %p74 = scmp.eq.s32.totalorder %s38, 1
      %p75 = por %p73, %p74
      %p77 = scmp.ne.s32.totalorder %s60, %s76
      %p78 = scmp.eq.s32.totalorder %s38, 0
      %p79 = por %p77, %p78
      %s80 = ssub.s32 %s39, %s51
      %p81 = scmp.eq.s32.totalorder %s80, 0
      %s83 = sadd.s32 %s82, 1
      %s84 = scalar_select %p81, %s82, %s83
      %p87 = pneg %p81
      %p88 = scmp.eq.s32.totalorder %s32, 1
      %p89 = por %p87, %p88
      %p90 = scmp.ne.s32.totalorder %s82, %s85
      %p91 = scmp.eq.s32.totalorder %s32, 0
      %p92 = por %p90, %p91
      %p93 = scmp.ne.s32.totalorder %s82, %s85
      %p94 = scmp.eq.s32.totalorder %s37, 1
      %p95 = por %p93, %p94
      %p96 = scmp.ne.s32.totalorder %s85, %s86
      %p97 = scmp.eq.s32.totalorder %s37, 0
      %p98 = por %p96, %p97
      %p99 = scmp.ne.s32.totalorder %s85, %s86
      %p100 = scmp.eq.s32.totalorder %s38, 1
      %p101 = por %p99, %p100
      %p103 = scmp.ne.s32.totalorder %s86, %s102
      %p104 = scmp.eq.s32.totalorder %s38, 0
      %p105 = por %p103, %p104
      %s106 = ssub.s32 %s39, %s51
      %p107 = scmp.eq.s32.totalorder %s106, 0
      %s109 = sadd.s32 %s108, 1
      %s110 = scalar_select %p107, %s108, %s109
      %p113 = pneg %p107
      %p114 = scmp.eq.s32.totalorder %s32, 1
      %p115 = por %p113, %p114
      %p116 = scmp.ne.s32.totalorder %s108, %s111
      %p117 = scmp.eq.s32.totalorder %s32, 0
      %p118 = por %p116, %p117
      %p119 = scmp.ne.s32.totalorder %s108, %s111
      %p120 = scmp.eq.s32.totalorder %s37, 1
      %p121 = por %p119, %p120
      %p122 = scmp.ne.s32.totalorder %s111, %s112
      %p123 = scmp.eq.s32.totalorder %s37, 0
      %p124 = por %p122, %p123
      %p125 = scmp.ne.s32.totalorder %s111, %s112
      %p126 = scmp.eq.s32.totalorder %s38, 1
      %p127 = por %p125, %p126
      %p129 = scmp.ne.s32.totalorder %s112, %s128
      %p130 = scmp.eq.s32.totalorder %s38, 0
      %p131 = por %p129, %p130
      %s133 = sadd.s32 %s132, 1
      %p136 = scmp.eq.s32.totalorder %s32, 1
      %p137 = scmp.ne.s32.totalorder %s132, %s134
      %p138 = scmp.eq.s32.totalorder %s32, 0
      %p139 = por %p137, %p138
      %p140 = scmp.ne.s32.totalorder %s132, %s134
      %p141 = scmp.eq.s32.totalorder %s37, 1
      %p142 = por %p140, %p141
      %p143 = scmp.ne.s32.totalorder %s134, %s135
      %p144 = scmp.eq.s32.totalorder %s37, 0
      %p145 = por %p143, %p144
      %p146 = scmp.ne.s32.totalorder %s134, %s135
      %p147 = scmp.eq.s32.totalorder %s38, 1
      %p148 = por %p146, %p147
      %p150 = scmp.ne.s32.totalorder %s135, %s149
      %p151 = scmp.eq.s32.totalorder %s38, 0
      %p152 = por %p150, %p151
      %s154 = sadd.s32 %s153, 1
      %p157 = scmp.eq.s32.totalorder %s32, 1
      %p158 = scmp.ne.s32.totalorder %s153, %s155
      %p159 = scmp.eq.s32.totalorder %s32, 0
      %p160 = por %p158, %p159
      %p161 = scmp.ne.s32.totalorder %s153, %s155
      %p162 = scmp.eq.s32.totalorder %s37, 1
      %p163 = por %p161, %p162
      %p164 = scmp.ne.s32.totalorder %s155, %s156
      %p165 = scmp.eq.s32.totalorder %s37, 0
      %p166 = por %p164, %p165
      %p167 = scmp.ne.s32.totalorder %s155, %s156
      %p168 = scmp.eq.s32.totalorder %s38, 1
      %p169 = por %p167, %p168
      %p171 = scmp.ne.s32.totalorder %s156, %s170
      %p172 = scmp.eq.s32.totalorder %s38, 0
      %p173 = por %p171, %p172
      %s175 = sadd.s32 %s174, 1
      %p178 = scmp.eq.s32.totalorder %s32, 1
      %p179 = scmp.ne.s32.totalorder %s174, %s176
      %p180 = scmp.eq.s32.totalorder %s32, 0
      %p181 = por %p179, %p180
      %p182 = scmp.ne.s32.totalorder %s174, %s176
      %p183 = scmp.eq.s32.totalorder %s37, 1
      %p184 = por %p182, %p183
      %p185 = scmp.ne.s32.totalorder %s176, %s177
      %p186 = scmp.eq.s32.totalorder %s37, 0
      %p187 = por %p185, %p186
      %p188 = scmp.ne.s32.totalorder %s176, %s177
      %p189 = scmp.eq.s32.totalorder %s38, 1
      %p190 = por %p188, %p189
      %p192 = scmp.ne.s32.totalorder %s177, %s191
      %p193 = scmp.eq.s32.totalorder %s38, 0
      %p194 = por %p192, %p193
      %s196 = sadd.s32 %s195, 1
      %p199 = scmp.eq.s32.totalorder %s32, 1
      %p200 = scmp.ne.s32.totalorder %s195, %s197
      %p201 = scmp.eq.s32.totalorder %s32, 0
      %p202 = por %p200, %p201
      %p203 = scmp.ne.s32.totalorder %s195, %s197
      %p204 = scmp.eq.s32.totalorder %s37, 1
      %p205 = por %p203, %p204
      %p206 = scmp.ne.s32.totalorder %s197, %s198
      %p207 = scmp.eq.s32.totalorder %s37, 0
      %p208 = por %p206, %p207
      %p209 = scmp.ne.s32.totalorder %s197, %s198
      %p210 = scmp.eq.s32.totalorder %s38, 1
      %p211 = por %p209, %p210
      %p213 = scmp.ne.s32.totalorder %s198, %s212
      %p214 = scmp.eq.s32.totalorder %s38, 0
      %p215 = por %p213, %p214
      %s217 = sadd.s32 %s216, 1
      %p220 = scmp.eq.s32.totalorder %s32, 1
      %p221 = scmp.ne.s32.totalorder %s216, %s218
      %p222 = scmp.eq.s32.totalorder %s32, 0
      %p223 = por %p221, %p222
      %p224 = scmp.ne.s32.totalorder %s216, %s218
      %p225 = scmp.eq.s32.totalorder %s37, 1
      %p226 = por %p224, %p225
      %p227 = scmp.ne.s32.totalorder %s218, %s219
      %p228 = scmp.eq.s32.totalorder %s37, 0
      %p229 = por %p227, %p228
      %p230 = scmp.ne.s32.totalorder %s218, %s219
      %p231 = scmp.eq.s32.totalorder %s38, 1
      %p232 = por %p230, %p231
      %p234 = scmp.ne.s32.totalorder %s219, %s233
      %p235 = scmp.eq.s32.totalorder %s38, 0
      %p236 = por %p234, %p235
      %s238 = sadd.s32 %s237, 1
      %p241 = scmp.eq.s32.totalorder %s32, 1
      %p242 = scmp.ne.s32.totalorder %s237, %s239
      %p243 = scmp.eq.s32.totalorder %s32, 0
      %p244 = por %p242, %p243
      %p245 = scmp.ne.s32.totalorder %s237, %s239
      %p246 = scmp.eq.s32.totalorder %s37, 1
      %p247 = por %p245, %p246
      %p248 = scmp.ne.s32.totalorder %s239, %s240
      %p249 = scmp.eq.s32.totalorder %s37, 0
      %p250 = por %p248, %p249
      %p251 = scmp.ne.s32.totalorder %s239, %s240
      %p252 = scmp.eq.s32.totalorder %s38, 1
      %p253 = por %p251, %p252
      %p255 = scmp.ne.s32.totalorder %s240, %s254
      %p256 = scmp.eq.s32.totalorder %s38, 0
      %p257 = por %p255, %p256
      %s259 = sadd.s32 %s258, 1
      %p262 = scmp.eq.s32.totalorder %s32, 1
      %p263 = scmp.ne.s32.totalorder %s258, %s260
      %p264 = scmp.eq.s32.totalorder %s32, 0
      %p265 = por %p263, %p264
      %p266 = scmp.ne.s32.totalorder %s258, %s260
      %p267 = scmp.eq.s32.totalorder %s37, 1
      %p268 = por %p266, %p267
      %p269 = scmp.ne.s32.totalorder %s260, %s261
      %p270 = scmp.eq.s32.totalorder %s37, 0
      %p271 = por %p269, %p270
      %p272 = scmp.ne.s32.totalorder %s260, %s261
      %p273 = scmp.eq.s32.totalorder %s38, 1
      %p274 = por %p272, %p273
      %p276 = scmp.ne.s32.totalorder %s261, %s275
      %p277 = scmp.eq.s32.totalorder %s38, 0
      %p278 = por %p276, %p277
      %s279 = ssub.s32 %s39, %s51
      %s280 = ssub.s32 %s40, %s47
      %s281 = sor.u32 %s279, %s280
      %p282 = scmp.eq.s32.totalorder %s281, 0
      %s284 = sadd.s32 %s283, 1
      %s285 = scalar_select %p282, %s283, %s284
      %p288 = pneg %p282
      %p289 = scmp.eq.s32.totalorder %s32, 1
      %p290 = por %p288, %p289
      %p291 = scmp.ne.s32.totalorder %s283, %s286
      %p292 = scmp.eq.s32.totalorder %s32, 0
      %p293 = por %p291, %p292
      %p294 = scmp.ne.s32.totalorder %s283, %s286
      %p295 = scmp.eq.s32.totalorder %s37, 1
      %p296 = por %p294, %p295
      %p297 = scmp.ne.s32.totalorder %s286, %s287
      %p298 = scmp.eq.s32.totalorder %s37, 0
      %p299 = por %p297, %p298
      %p300 = scmp.ne.s32.totalorder %s286, %s287
      %p301 = scmp.eq.s32.totalorder %s38, 1
      %p302 = por %p300, %p301
      %p304 = scmp.ne.s32.totalorder %s287, %s303
      %p305 = scmp.eq.s32.totalorder %s38, 0
      %p306 = por %p304, %p305
      %s307 = ssub.s32 %s39, %s51
      %s308 = ssub.s32 %s40, %s47
      %s309 = sor.u32 %s307, %s308
      %p310 = scmp.eq.s32.totalorder %s309, 0
      %s312 = sadd.s32 %s311, 1
      %s313 = scalar_select %p310, %s311, %s312
      %p316 = pneg %p310
      %p317 = scmp.eq.s32.totalorder %s32, 1
      %p318 = por %p316, %p317
      %p319 = scmp.ne.s32.totalorder %s311, %s314
      %p320 = scmp.eq.s32.totalorder %s32, 0
      %p321 = por %p319, %p320
      %p322 = scmp.ne.s32.totalorder %s311, %s314
      %p323 = scmp.eq.s32.totalorder %s37, 1
      %p324 = por %p322, %p323
      %p325 = scmp.ne.s32.totalorder %s314, %s315
      %p326 = scmp.eq.s32.totalorder %s37, 0
      %p327 = por %p325, %p326
      %p328 = scmp.ne.s32.totalorder %s314, %s315
      %p329 = scmp.eq.s32.totalorder %s38, 1
      %p330 = por %p328, %p329
      %p332 = scmp.ne.s32.totalorder %s315, %s331
      %p333 = scmp.eq.s32.totalorder %s38, 0
      %p334 = por %p332, %p333
      %p335 = scmp.le.s32.totalorder 1, %s32
      %p336 = scmp.lt.s32.totalorder %s32, 3
      %p337 = pnand %p335, %p336
      %p338 = pneg %p337
      // Predicated region
      $region9: #{tpu_custom_call.1} parent=5 // pred_check
        _
      $region10: #{tpu_custom_call.1} parent=5 // pred_check_branch
        %340 = sbr.rel (%p337) target = $region12
      $region11: #{tpu_custom_call.1} parent=5 // pred_region
        %s341 = ssub.s32 %s32, 1
        // Predicated region
        $region13: #{tpu_custom_call.1} parent=11 // pred_check
          %p342 = pneg %p145
        $region14: #{tpu_custom_call.1} parent=11 // pred_check_branch
          %344 = sbr.rel (%p342) target = $region16
        $region15: #{tpu_custom_call.1} parent=11 // pred_region
          %s346 = ssub.s32 512, 512
          %347 = vsyncadd [#allocation11], %s346
          %s348 = sshll.u32 [#allocation10], 4
          %s349 = int_to_ptr.vmem [resolvable:$true] %s348
          %354 = dma.hbm_to_vmem [thread:$0]  %s3, 512, %s349, [#allocation11], 128, 128, 8
        $region16: #{tpu_custom_call.1} parent=11 // pred_fallthru
          _
        // Predicated region
        $region17: #{tpu_custom_call.1} parent=11 // pred_check
          %p355 = pneg %p166
        $region18: #{tpu_custom_call.1} parent=11 // pred_check_branch
          %357 = sbr.rel (%p355) target = $region20
        $region19: #{tpu_custom_call.1} parent=11 // pred_region
          _
        $region20: #{tpu_custom_call.1} parent=11 // pred_fallthru
          _
        // Predicated region
        $region21: #{tpu_custom_call.1} parent=11 // pred_check
          %p358 = pneg %p187
        $region22: #{tpu_custom_call.1} parent=11 // pred_check_branch
          %360 = sbr.rel (%p358) target = $region24
        $region23: #{tpu_custom_call.1} parent=11 // pred_region
          %s362 = ssub.s32 512, 512
          %363 = vsyncadd [#allocation11], %s362
          %s364 = sshll.u32 [#allocation12], 4
          %s365 = int_to_ptr.vmem [resolvable:$true] %s364
          %370 = dma.hbm_to_vmem [thread:$0]  %s5, 512, %s365, [#allocation11], 128, 128, 8
        $region24: #{tpu_custom_call.1} parent=11 // pred_fallthru
          _
        // Predicated region
        $region25: #{tpu_custom_call.1} parent=11 // pred_check
          %p371 = pneg %p208
        $region26: #{tpu_custom_call.1} parent=11 // pred_check_branch
          %373 = sbr.rel (%p371) target = $region28
        $region27: #{tpu_custom_call.1} parent=11 // pred_region
          _
        $region28: #{tpu_custom_call.1} parent=11 // pred_fallthru
          _
        // Predicated region
        $region29: #{tpu_custom_call.1} parent=11 // pred_check
          %p374 = pneg %p229
        $region30: #{tpu_custom_call.1} parent=11 // pred_check_branch
          %376 = sbr.rel (%p374) target = $region32
        $region31: #{tpu_custom_call.1} parent=11 // pred_region
          %s378 = ssub.s32 512, 512
          %379 = vsyncadd [#allocation14], %s378
          %s380 = sshll.u32 [#allocation13], 4
          %s381 = int_to_ptr.vmem [resolvable:$true] %s380
          %386 = dma.hbm_to_vmem [thread:$0]  %s7, 512, %s381, [#allocation14], 128, 128, 8
        $region32: #{tpu_custom_call.1} parent=11 // pred_fallthru
          _
        // Predicated region
        $region33: #{tpu_custom_call.1} parent=11 // pred_check
          %p387 = pneg %p250
        $region34: #{tpu_custom_call.1} parent=11 // pred_check_branch
          %389 = sbr.rel (%p387) target = $region36
        $region35: #{tpu_custom_call.1} parent=11 // pred_region
          _
        $region36: #{tpu_custom_call.1} parent=11 // pred_fallthru
          _
        // Predicated region
        $region37: #{tpu_custom_call.1} parent=11 // pred_check
          %p390 = pneg %p271
        $region38: #{tpu_custom_call.1} parent=11 // pred_check_branch
          %392 = sbr.rel (%p390) target = $region40
        $region39: #{tpu_custom_call.1} parent=11 // pred_region
          %s394 = ssub.s32 512, 512
          %395 = vsyncadd [#allocation14], %s394
          %s396 = sshll.u32 [#allocation15], 4
          %s397 = int_to_ptr.vmem [resolvable:$true] %s396
          %402 = dma.hbm_to_vmem [thread:$0]  %s9, 512, %s397, [#allocation14], 128, 128, 8
        $region40: #{tpu_custom_call.1} parent=11 // pred_fallthru
          _
      $region12: #{tpu_custom_call.1} parent=5 // pred_fallthru
        _
      %p403 = scmp.lt.s32.totalorder %s32, 2
      // Predicated region
      $region41: #{tpu_custom_call.1} parent=5 // pred_check
        %p404 = pneg %p403
      $region42: #{tpu_custom_call.1} parent=5 // pred_check_branch
        %406 = sbr.rel (%p404) target = $region44
      $region43: #{tpu_custom_call.1} parent=5 // pred_region
        // Predicated region
        $region45: #{tpu_custom_call.1} parent=43 // pred_check
          %p407 = pneg %p66
        $region46: #{tpu_custom_call.1} parent=43 // pred_check_branch
          %409 = sbr.rel (%p407) target = $region48
        $region47: #{tpu_custom_call.1} parent=43 // pred_region
          %s410 = sand.u32 %s56, 1
          %s411 = scalar_lea.sflag [#allocation5], %s410
          %s412 = sand.u32 %s56, 1
          %s413 = smul.addr %s412, 8
          %s414 = scalar_lea.vmem [#allocation4], %s413
          %s416 = ssub.s32 128, 128
          %417 = vsyncadd %s411, %s416
          %s418 = sadd.s32 %s40, %s39
          %s419 = smul.addr %s418, 128
          %s420 = scalar_lea.hbm %s0, %s419
          %s422 = sshll.u32 %s414, 4
          %s423 = int_to_ptr.vmem [resolvable:$true] %s422
          %425 = dma.hbm_to_vmem [thread:$0]  %s420, 128, %s423, %s411
        $region48: #{tpu_custom_call.1} parent=43 // pred_fallthru
          _
        // Predicated region
        $region49: #{tpu_custom_call.1} parent=43 // pred_check
          %p426 = pneg %p92
        $region50: #{tpu_custom_call.1} parent=43 // pred_check_branch
          %428 = sbr.rel (%p426) target = $region52
        $region51: #{tpu_custom_call.1} parent=43 // pred_region
          %s429 = sand.u32 %s32, 1
          %s430 = scalar_lea.sflag [#allocation8], %s429
          %s431 = sand.u32 %s82, 1
          %s432 = smul.addr %s431, 8
          %s433 = scalar_lea.vmem [#allocation7], %s432
          %s435 = ssub.s32 128, 128
          %436 = vsyncadd %s430, %s435
          %s437 = smul.addr %s39, 128
          %s438 = scalar_lea.hbm %s1, %s437
          %s440 = sshll.u32 %s433, 4
          %s441 = int_to_ptr.vmem [resolvable:$true] %s440
          %443 = dma.hbm_to_vmem [thread:$0]  %s438, 128, %s441, %s430
        $region52: #{tpu_custom_call.1} parent=43 // pred_fallthru
          _
        // Predicated region
        $region53: #{tpu_custom_call.1} parent=43 // pred_check
          %p444 = pneg %p118
        $region54: #{tpu_custom_call.1} parent=43 // pred_check_branch
          %446 = sbr.rel (%p444) target = $region56
        $region55: #{tpu_custom_call.1} parent=43 // pred_region
          %s447 = sand.u32 %s32, 1
          %s448 = scalar_lea.sflag [#allocation8], %s447
          %s449 = sand.u32 %s108, 1
          %s450 = smul.addr %s449, 8
          %s451 = scalar_lea.vmem [#allocation9], %s450
          %s453 = ssub.s32 128, 128
          %454 = vsyncadd %s448, %s453
          %s455 = smul.addr %s39, 128
          %s456 = scalar_lea.hbm %s2, %s455
          %s458 = sshll.u32 %s451, 4
          %s459 = int_to_ptr.vmem [resolvable:$true] %s458
          %461 = dma.hbm_to_vmem [thread:$0]  %s456, 128, %s459, %s448
        $region56: #{tpu_custom_call.1} parent=43 // pred_fallthru
          _
      $region44: #{tpu_custom_call.1} parent=5 // pred_fallthru
        _
      %p462 = scmp.le.s32.totalorder 1, %s32
      %p463 = scmp.lt.s32.totalorder %s32, 3
      %p464 = pnand %p462, %p463
      %p465 = pneg %p464
      // Predicated region
      $region57: #{tpu_custom_call.1} parent=5 // pred_check
        _
      $region58: #{tpu_custom_call.1} parent=5 // pred_check_branch
        %467 = sbr.rel (%p464) target = $region60
      $region59: #{tpu_custom_call.1} parent=5 // pred_region
        %s468 = ssub.s32 %s32, 1
        %s469 = sand.u32 %s59, 1
        %s470 = scalar_lea.sflag [#allocation5], %s469
        %s471 = sand.u32 %s59, 1
        %s472 = smul.addr %s471, 8
        %s473 = scalar_lea.vmem [#allocation4], %s472
        // Predicated region
        $region61: #{tpu_custom_call.1} parent=59 // pred_check
          %p474 = pneg %p72
        $region62: #{tpu_custom_call.1} parent=59 // pred_check_branch
          %476 = sbr.rel (%p474) target = $region64
        $region63: #{tpu_custom_call.1} parent=59 // pred_region
          %477 = dma.done %s470, 128
        $region64: #{tpu_custom_call.1} parent=59 // pred_fallthru
          _
        %s478 = sand.u32 %s37, 1
        %s479 = scalar_lea.sflag [#allocation8], %s478
        %s480 = sand.u32 %s85, 1
        %s481 = smul.addr %s480, 8
        %s482 = scalar_lea.vmem [#allocation7], %s481
        // Predicated region
        $region65: #{tpu_custom_call.1} parent=59 // pred_check
          %p483 = pneg %p98
        $region66: #{tpu_custom_call.1} parent=59 // pred_check_branch
          %485 = sbr.rel (%p483) target = $region68
        $region67: #{tpu_custom_call.1} parent=59 // pred_region
          %486 = dma.done %s479, 128
        $region68: #{tpu_custom_call.1} parent=59 // pred_fallthru
          _
        %s487 = sand.u32 %s37, 1
        %s488 = scalar_lea.sflag [#allocation8], %s487
        %s489 = sand.u32 %s111, 1
        %s490 = smul.addr %s489, 8
        %s491 = scalar_lea.vmem [#allocation9], %s490
        // Predicated region
        $region69: #{tpu_custom_call.1} parent=59 // pred_check
          %p492 = pneg %p124
        $region70: #{tpu_custom_call.1} parent=59 // pred_check_branch
          %494 = sbr.rel (%p492) target = $region72
        $region71: #{tpu_custom_call.1} parent=59 // pred_region
          %495 = dma.done %s488, 128
        $region72: #{tpu_custom_call.1} parent=59 // pred_fallthru
          _
        // Predicated region
        $region73: #{tpu_custom_call.1} parent=59 // pred_check
          %p496 = pneg %p145
        $region74: #{tpu_custom_call.1} parent=59 // pred_check_branch
          %498 = sbr.rel (%p496) target = $region76
        $region75: #{tpu_custom_call.1} parent=59 // pred_region
          %499 = dma.done [#allocation11], 512
        $region76: #{tpu_custom_call.1} parent=59 // pred_fallthru
          _
        // Predicated region
        $region77: #{tpu_custom_call.1} parent=59 // pred_check
          %p500 = pneg %p187
        $region78: #{tpu_custom_call.1} parent=59 // pred_check_branch
          %502 = sbr.rel (%p500) target = $region80
        $region79: #{tpu_custom_call.1} parent=59 // pred_region
          %503 = dma.done [#allocation11], 512
        $region80: #{tpu_custom_call.1} parent=59 // pred_fallthru
          _
        // Predicated region
        $region81: #{tpu_custom_call.1} parent=59 // pred_check
          %p504 = pneg %p229
        $region82: #{tpu_custom_call.1} parent=59 // pred_check_branch
          %506 = sbr.rel (%p504) target = $region84
        $region83: #{tpu_custom_call.1} parent=59 // pred_region
          %507 = dma.done [#allocation14], 512
        $region84: #{tpu_custom_call.1} parent=59 // pred_fallthru
          _
        // Predicated region
        $region85: #{tpu_custom_call.1} parent=59 // pred_check
          %p508 = pneg %p271
        $region86: #{tpu_custom_call.1} parent=59 // pred_check_branch
          %510 = sbr.rel (%p508) target = $region88
        $region87: #{tpu_custom_call.1} parent=59 // pred_region
          %511 = dma.done [#allocation14], 512
        $region88: #{tpu_custom_call.1} parent=59 // pred_fallthru
          _
        %s512 = sand.u32 %s59, 1
        %s513 = scalar_lea.sflag [#allocation5], %s512
        %s514 = sand.u32 %s59, 1
        %s515 = smul.addr %s514, 8
        %s516 = scalar_lea.vmem [#allocation4], %s515
        %p517 = pneg %p72
        %p518 = pneg %p69
        %s519 = sand.u32 %s37, 1
        %s520 = scalar_lea.sflag [#allocation8], %s519
        %s521 = sand.u32 %s85, 1
        %s522 = smul.addr %s521, 8
        %s523 = scalar_lea.vmem [#allocation7], %s522
        %p524 = pneg %p98
        %p525 = pneg %p95
        %s526 = sand.u32 %s37, 1
        %s527 = scalar_lea.sflag [#allocation8], %s526
        %s528 = sand.u32 %s111, 1
        %s529 = smul.addr %s528, 8
        %s530 = scalar_lea.vmem [#allocation9], %s529
        %p531 = pneg %p124
        %p532 = pneg %p121
        %p533 = pneg %p145
        %p534 = pneg %p142
        %p535 = pneg %p166
        %p536 = pneg %p163
        %p537 = pneg %p187
        %p538 = pneg %p184
        %p539 = pneg %p208
        %p540 = pneg %p205
        %p541 = pneg %p229
        %p542 = pneg %p226
        %p543 = pneg %p250
        %p544 = pneg %p247
        %p545 = pneg %p271
        %p546 = pneg %p268
        %p547 = pneg %p299
        %p548 = pneg %p296
        %s549 = sand.u32 %s286, 1
        %s550 = scalar_lea.sflag [#allocation6], %s549
        %s551 = sand.u32 %s286, 1
        %s552 = smul.addr %s551, 8
        %s553 = scalar_lea.vmem [#allocation16], %s552
        %p554 = pneg %p327
        %p555 = pneg %p324
        %s556 = sand.u32 %s314, 1
        %s557 = scalar_lea.sflag [#allocation18], %s556
        %s558 = sand.u32 %s314, 1
        %s559 = smul.addr %s558, 32
        %s560 = scalar_lea.vmem [#allocation17], %s559
        %p561 = scmp.eq.s32.totalorder %s42, 0
        // Predicated region
        $region89: #{tpu_custom_call.1} parent=59 // pred_check
          %p562 = pneg %p561
        $region90: #{tpu_custom_call.1} parent=59 // pred_check_branch
          %564 = sbr.rel (%p562) target = $region92
        $region91: #{tpu_custom_call.1} parent=59 // pred_region
          %v565 = vld [vmem:[%s482] sm:$0xff]
          %v566 = vld [vmem:[%s491] sm:$0xff]
          %v567 = vld [vmem:[#allocation12] sm:$0xff]
          %v568 = vld [vmem:[#allocation12 + $0x8] sm:$0xff]
          %v569 = vld [vmem:[#allocation12 + $0x10] sm:$0xff]
          %v570 = vld [vmem:[#allocation12 + $0x18] sm:$0xff]
          %v571 = vld [vmem:[%s6] sm:$0x1]
          %v573 = vlaneseq
          %v574 = vshrl.u32 %v573, 7
          %v575 = vsub.s32 0, %v574
          %v576 = vrot.slane %v571, %v575
          %vm578 = vcmask 261120
          %v580 = vsel %vm578, %v565, 0
          %v583 = vsel %vm578, %v567, 0
          %v586 = vsel %vm578, %v568, 0
          %v589 = vsel %vm578, %v569, 0
          %v592 = vsel %vm578, %v570, 0
          %594 = vmatprep.subr.mxu0 0.0
          %595 = vmatpush1.xpose.msra.mxu0 0.0
          %596 = vmatprep.subr.mxu0 0.0
          %597 = vmatpush1.xpose.msra.mxu0 0.0
          %598 = vmatprep.subr.mxu0 0.0
          %599 = vmatpush1.xpose.msra.mxu0 0.0
          %600 = vmatprep.subr.mxu0 0.0
          %601 = vmatpush1.xpose.msra.mxu0 0.0
          %602 = vmatprep.subr.mxu0 0.0
          %603 = vmatpush1.xpose.msra.mxu0 0.0
          %604 = vmatprep.subr.mxu0 0.0
          %605 = vmatpush1.xpose.msra.mxu0 0.0
          %606 = vmatprep.subr.mxu0 0.0
          %607 = vmatpush1.xpose.msra.mxu0 0.0
          %608 = vmatprep.subr.mxu0 0.0
          %609 = vmatpush1.xpose.msra.mxu0 0.0
          %610 = vmatprep.subr.mxu0 0.0
          %611 = vmatpush1.xpose.msra.mxu0 0.0
          %612 = vmatprep.subr.mxu0 0.0
          %613 = vmatpush1.xpose.msra.mxu0 0.0
          %614 = vmatprep.subr.mxu0 0.0
          %615 = vmatpush1.xpose.msra.mxu0 0.0
          %616 = vmatprep.subr.mxu0 0.0
          %617 = vmatpush1.xpose.msra.mxu0 0.0
          %618 = vmatprep.subr.mxu0 0.0
          %619 = vmatpush1.xpose.msra.mxu0 %v592
          %620 = vmatprep.subr.mxu0 0.0
          %621 = vmatpush1.xpose.msra.mxu0 %v589
          %622 = vmatprep.subr.mxu0 0.0
          %623 = vmatpush1.xpose.msra.mxu0 %v586
          %624 = vmatprep.subr.mxu0 0.0
          %625 = vmatpush1.xpose.msra.mxu0 %v583
          %626 = vmatprep.subr.mxu0 0.0
          %627 = vmatpush2.xpose.msra.mxu0 0.0
          %628 = vmatprep.subr.mxu0 0.0
          %629 = vmatpush2.xpose.msra.mxu0 0.0
          %630 = vmatprep.subr.mxu0 0.0
          %631 = vmatpush2.xpose.msra.mxu0 0.0
          %632 = vmatprep.subr.mxu0 0.0
          %633 = vmatpush2.xpose.msra.mxu0 0.0
          %634 = vmatprep.subr.mxu0 0.0
          %635 = vmatpush2.xpose.msra.mxu0 0.0
          %636 = vmatprep.subr.mxu0 0.0
          %637 = vmatpush2.xpose.msra.mxu0 0.0
          %638 = vmatprep.subr.mxu0 0.0
          %639 = vmatpush2.xpose.msra.mxu0 0.0
          %640 = vmatprep.subr.mxu0 0.0
          %641 = vmatpush2.xpose.msra.mxu0 0.0
          %642 = vmatprep.subr.mxu0 0.0
          %643 = vmatpush2.xpose.msra.mxu0 0.0
          %644 = vmatprep.subr.mxu0 0.0
          %645 = vmatpush2.xpose.msra.mxu0 0.0
          %646 = vmatprep.subr.mxu0 0.0
          %647 = vmatpush2.xpose.msra.mxu0 0.0
          %648 = vmatprep.subr.mxu0 0.0
          %649 = vmatpush2.xpose.msra.mxu0 0.0
          %650 = vmatprep.subr.mxu0 0.0
          %651 = vmatpush2.xpose.msra.mxu0 0.0
          %652 = vmatprep.subr.mxu0 0.0
          %653 = vmatpush2.xpose.msra.mxu0 0.0
          %654 = vmatprep.subr.mxu0 0.0
          %655 = vmatpush2.xpose.msra.mxu0 0.0
          %656 = vmatprep.subr.mxu0 0.0
          %657 = vmatpush2.xpose.msra.mxu0 0.0
          %658 = vmatprep.mubr.f32.mxu0 0.0
          %659 = vmatmul.mubr.f32.gmra.mxu0 %v580
          %v660 = vpop.f32.mrf.mxu0
          %v661 = vadd.f32 %v576, %v660
          %v662 = vpop.f32.mrf.mxu0
          %663 = vdwg.mxu0
          %v664 = vld [vmem:[#allocation13] sm:$0xff]
          %v665 = vld [vmem:[#allocation13 + $0x8] sm:$0xff]
          %v666 = vld [vmem:[#allocation13 + $0x10] sm:$0xff]
          %v667 = vld [vmem:[#allocation13 + $0x18] sm:$0xff]
          %v668 = vld [vmem:[%s8] sm:$0x1]
          %v670 = vlaneseq
          %v671 = vshrl.u32 %v670, 7
          %v672 = vsub.s32 0, %v671
          %v673 = vrot.slane %v668, %v672
          %v676 = vsel %vm578, %v566, 0
          %v679 = vsel %vm578, %v664, 0
          %v682 = vsel %vm578, %v665, 0
          %v685 = vsel %vm578, %v666, 0
          %v688 = vsel %vm578, %v667, 0
          %690 = vmatprep.subr.mxu0 0.0
          %691 = vmatpush1.xpose.msra.mxu0 0.0
          %692 = vmatprep.subr.mxu0 0.0
          %693 = vmatpush1.xpose.msra.mxu0 0.0
          %694 = vmatprep.subr.mxu0 0.0
          %695 = vmatpush1.xpose.msra.mxu0 0.0
          %696 = vmatprep.subr.mxu0 0.0
          %697 = vmatpush1.xpose.msra.mxu0 0.0
          %698 = vmatprep.subr.mxu0 0.0
          %699 = vmatpush1.xpose.msra.mxu0 0.0
          %700 = vmatprep.subr.mxu0 0.0
          %701 = vmatpush1.xpose.msra.mxu0 0.0
          %702 = vmatprep.subr.mxu0 0.0
          %703 = vmatpush1.xpose.msra.mxu0 0.0
          %704 = vmatprep.subr.mxu0 0.0
          %705 = vmatpush1.xpose.msra.mxu0 0.0
          %706 = vmatprep.subr.mxu0 0.0
          %707 = vmatpush1.xpose.msra.mxu0 0.0
          %708 = vmatprep.subr.mxu0 0.0
          %709 = vmatpush1.xpose.msra.mxu0 0.0
          %710 = vmatprep.subr.mxu0 0.0
          %711 = vmatpush1.xpose.msra.mxu0 0.0
          %712 = vmatprep.subr.mxu0 0.0
          %713 = vmatpush1.xpose.msra.mxu0 0.0
          %714 = vmatprep.subr.mxu0 0.0
          %715 = vmatpush1.xpose.msra.mxu0 %v688
          %716 = vmatprep.subr.mxu0 0.0
          %717 = vmatpush1.xpose.msra.mxu0 %v685
          %718 = vmatprep.subr.mxu0 0.0
          %719 = vmatpush1.xpose.msra.mxu0 %v682
          %720 = vmatprep.subr.mxu0 0.0
          %721 = vmatpush1.xpose.msra.mxu0 %v679
          %722 = vmatprep.subr.mxu0 0.0
          %723 = vmatpush2.xpose.msra.mxu0 0.0
          %724 = vmatprep.subr.mxu0 0.0
          %725 = vmatpush2.xpose.msra.mxu0 0.0
          %726 = vmatprep.subr.mxu0 0.0
          %727 = vmatpush2.xpose.msra.mxu0 0.0
          %728 = vmatprep.subr.mxu0 0.0
          %729 = vmatpush2.xpose.msra.mxu0 0.0
          %730 = vmatprep.subr.mxu0 0.0
          %731 = vmatpush2.xpose.msra.mxu0 0.0
          %732 = vmatprep.subr.mxu0 0.0
          %733 = vmatpush2.xpose.msra.mxu0 0.0
          %734 = vmatprep.subr.mxu0 0.0
          %735 = vmatpush2.xpose.msra.mxu0 0.0
          %736 = vmatprep.subr.mxu0 0.0
          %737 = vmatpush2.xpose.msra.mxu0 0.0
          %738 = vmatprep.subr.mxu0 0.0
          %739 = vmatpush2.xpose.msra.mxu0 0.0
          %740 = vmatprep.subr.mxu0 0.0
          %741 = vmatpush2.xpose.msra.mxu0 0.0
          %742 = vmatprep.subr.mxu0 0.0
          %743 = vmatpush2.xpose.msra.mxu0 0.0
          %744 = vmatprep.subr.mxu0 0.0
          %745 = vmatpush2.xpose.msra.mxu0 0.0
          %746 = vmatprep.subr.mxu0 0.0
          %747 = vmatpush2.xpose.msra.mxu0 0.0
          %748 = vmatprep.subr.mxu0 0.0
          %749 = vmatpush2.xpose.msra.mxu0 0.0
          %750 = vmatprep.subr.mxu0 0.0
          %751 = vmatpush2.xpose.msra.mxu0 0.0
          %752 = vmatprep.subr.mxu0 0.0
          %753 = vmatpush2.xpose.msra.mxu0 0.0
          %754 = vmatprep.mubr.f32.mxu0 0.0
          %755 = vmatmul.mubr.f32.gmra.mxu0 %v676
          %v756 = vpop.f32.mrf.mxu0
          %v757 = vadd.f32 %v673, %v756
          %v758 = vpop.f32.mrf.mxu0
          %759 = vdwg.mxu0
          %760 = vst.msk [vmem:[#allocation2] sm:$0xff] %vm578, %v661
          %761 = vst.msk [vmem:[#allocation3] sm:$0xff] %vm578, %v757
        $region92: #{tpu_custom_call.1} parent=59 // pred_fallthru
          _
        %v762 = vld [vmem:[%s473] sm:$0xff]
        %v763 = vld [vmem:[#allocation10] sm:$0xff]
        %v764 = vld [vmem:[#allocation10 + $0x8] sm:$0xff]
        %v765 = vld [vmem:[#allocation10 + $0x10] sm:$0xff]
        %v766 = vld [vmem:[#allocation10 + $0x18] sm:$0xff]
        %v767 = vld [vmem:[%s4] sm:$0x1]
        %v769 = vlaneseq
        %v770 = vshrl.u32 %v769, 7
        %v771 = vsub.s32 0, %v770
        %v772 = vrot.slane %v767, %v771
        %vm774 = vcmask 261120
        %v776 = vsel %vm774, %v762, 0
        %v779 = vsel %vm774, %v763, 0
        %v782 = vsel %vm774, %v764, 0
        %v785 = vsel %vm774, %v765, 0
        %v788 = vsel %vm774, %v766, 0
        %790 = vmatprep.subr.mxu0 0.0
        %791 = vmatpush1.xpose.msra.mxu0 0.0
        %792 = vmatprep.subr.mxu0 0.0
        %793 = vmatpush1.xpose.msra.mxu0 0.0
        %794 = vmatprep.subr.mxu0 0.0
        %795 = vmatpush1.xpose.msra.mxu0 0.0
        %796 = vmatprep.subr.mxu0 0.0
        %797 = vmatpush1.xpose.msra.mxu0 0.0
        %798 = vmatprep.subr.mxu0 0.0
        %799 = vmatpush1.xpose.msra.mxu0 0.0
        %800 = vmatprep.subr.mxu0 0.0
        %801 = vmatpush1.xpose.msra.mxu0 0.0
        %802 = vmatprep.subr.mxu0 0.0
        %803 = vmatpush1.xpose.msra.mxu0 0.0
        %804 = vmatprep.subr.mxu0 0.0
        %805 = vmatpush1.xpose.msra.mxu0 0.0
        %806 = vmatprep.subr.mxu0 0.0
        %807 = vmatpush1.xpose.msra.mxu0 0.0
        %808 = vmatprep.subr.mxu0 0.0
        %809 = vmatpush1.xpose.msra.mxu0 0.0
        %810 = vmatprep.subr.mxu0 0.0
        %811 = vmatpush1.xpose.msra.mxu0 0.0
        %812 = vmatprep.subr.mxu0 0.0
        %813 = vmatpush1.xpose.msra.mxu0 0.0
        %814 = vmatprep.subr.mxu0 0.0
        %815 = vmatpush1.xpose.msra.mxu0 %v788
        %816 = vmatprep.subr.mxu0 0.0
        %817 = vmatpush1.xpose.msra.mxu0 %v785
        %818 = vmatprep.subr.mxu0 0.0
        %819 = vmatpush1.xpose.msra.mxu0 %v782
        %820 = vmatprep.subr.mxu0 0.0
        %821 = vmatpush1.xpose.msra.mxu0 %v779
        %822 = vmatprep.subr.mxu0 0.0
        %823 = vmatpush2.xpose.msra.mxu0 0.0
        %824 = vmatprep.subr.mxu0 0.0
        %825 = vmatpush2.xpose.msra.mxu0 0.0
        %826 = vmatprep.subr.mxu0 0.0
        %827 = vmatpush2.xpose.msra.mxu0 0.0
        %828 = vmatprep.subr.mxu0 0.0
        %829 = vmatpush2.xpose.msra.mxu0 0.0
        %830 = vmatprep.subr.mxu0 0.0
        %831 = vmatpush2.xpose.msra.mxu0 0.0
        %832 = vmatprep.subr.mxu0 0.0
        %833 = vmatpush2.xpose.msra.mxu0 0.0
        %834 = vmatprep.subr.mxu0 0.0
        %835 = vmatpush2.xpose.msra.mxu0 0.0
        %836 = vmatprep.subr.mxu0 0.0
        %837 = vmatpush2.xpose.msra.mxu0 0.0
        %838 = vmatprep.subr.mxu0 0.0
        %839 = vmatpush2.xpose.msra.mxu0 0.0
        %840 = vmatprep.subr.mxu0 0.0
        %841 = vmatpush2.xpose.msra.mxu0 0.0
        %842 = vmatprep.subr.mxu0 0.0
        %843 = vmatpush2.xpose.msra.mxu0 0.0
        %844 = vmatprep.subr.mxu0 0.0
        %845 = vmatpush2.xpose.msra.mxu0 0.0
        %846 = vmatprep.subr.mxu0 0.0
        %847 = vmatpush2.xpose.msra.mxu0 0.0
        %848 = vmatprep.subr.mxu0 0.0
        %849 = vmatpush2.xpose.msra.mxu0 0.0
        %850 = vmatprep.subr.mxu0 0.0
        %851 = vmatpush2.xpose.msra.mxu0 0.0
        %852 = vmatprep.subr.mxu0 0.0
        %853 = vmatpush2.xpose.msra.mxu0 0.0
        %854 = vmatprep.mubr.f32.mxu0 0.0
        %855 = vmatmul.mubr.f32.gmra.mxu0 %v776
        %v856 = vpop.f32.mrf.mxu0
        %v857 = vadd.f32 %v772, %v856
        %v858 = vpop.f32.mrf.mxu0
        %859 = vdwg.mxu0
        %v860 = vld [vmem:[#allocation2] sm:$0xff]
        %v861 = vld [vmem:[#allocation3] sm:$0xff]
        %vm862 = vcmask 64512
        %v864 = vsel %vm862, %v857, 0
        %v867 = vsel %vm862, %v860, 0
        %869 = vmatprep.subr.mxu0 0.0
        %870 = vmatpush1.xpose.msra.mxu0 0.0
        %871 = vmatprep.subr.mxu0 0.0
        %872 = vmatpush1.xpose.msra.mxu0 0.0
        %873 = vmatprep.subr.mxu0 0.0
        %874 = vmatpush1.xpose.msra.mxu0 0.0
        %875 = vmatprep.subr.mxu0 0.0
        %876 = vmatpush1.xpose.msra.mxu0 0.0
        %877 = vmatprep.subr.mxu0 0.0
        %878 = vmatpush1.xpose.msra.mxu0 0.0
        %879 = vmatprep.subr.mxu0 0.0
        %880 = vmatpush1.xpose.msra.mxu0 0.0
        %881 = vmatprep.subr.mxu0 0.0
        %882 = vmatpush1.xpose.msra.mxu0 0.0
        %883 = vmatprep.subr.mxu0 0.0
        %884 = vmatpush1.xpose.msra.mxu0 0.0
        %885 = vmatprep.subr.mxu0 0.0
        %886 = vmatpush1.xpose.msra.mxu0 0.0
        %887 = vmatprep.subr.mxu0 0.0
        %888 = vmatpush1.xpose.msra.mxu0 0.0
        %889 = vmatprep.subr.mxu0 0.0
        %890 = vmatpush1.xpose.msra.mxu0 0.0
        %891 = vmatprep.subr.mxu0 0.0
        %892 = vmatpush1.xpose.msra.mxu0 0.0
        %893 = vmatprep.subr.mxu0 0.0
        %894 = vmatpush1.xpose.msra.mxu0 0.0
        %895 = vmatprep.subr.mxu0 0.0
        %896 = vmatpush1.xpose.msra.mxu0 0.0
        %897 = vmatprep.subr.mxu0 0.0
        %898 = vmatpush1.xpose.msra.mxu0 0.0
        %899 = vmatprep.subr.mxu0 0.0
        %900 = vmatpush1.xpose.msra.mxu0 %v867
        %901 = vmatprep.subr.mxu0 0.0
        %902 = vmatpush2.xpose.msra.mxu0 0.0
        %903 = vmatprep.subr.mxu0 0.0
        %904 = vmatpush2.xpose.msra.mxu0 0.0
        %905 = vmatprep.subr.mxu0 0.0
        %906 = vmatpush2.xpose.msra.mxu0 0.0
        %907 = vmatprep.subr.mxu0 0.0
        %908 = vmatpush2.xpose.msra.mxu0 0.0
        %909 = vmatprep.subr.mxu0 0.0
        %910 = vmatpush2.xpose.msra.mxu0 0.0
        %911 = vmatprep.subr.mxu0 0.0
        %912 = vmatpush2.xpose.msra.mxu0 0.0
        %913 = vmatprep.subr.mxu0 0.0
        %914 = vmatpush2.xpose.msra.mxu0 0.0
        %915 = vmatprep.subr.mxu0 0.0
        %916 = vmatpush2.xpose.msra.mxu0 0.0
        %917 = vmatprep.subr.mxu0 0.0
        %918 = vmatpush2.xpose.msra.mxu0 0.0
        %919 = vmatprep.subr.mxu0 0.0
        %920 = vmatpush2.xpose.msra.mxu0 0.0
        %921 = vmatprep.subr.mxu0 0.0
        %922 = vmatpush2.xpose.msra.mxu0 0.0
        %923 = vmatprep.subr.mxu0 0.0
        %924 = vmatpush2.xpose.msra.mxu0 0.0
        %925 = vmatprep.subr.mxu0 0.0
        %926 = vmatpush2.xpose.msra.mxu0 0.0
        %927 = vmatprep.subr.mxu0 0.0
        %928 = vmatpush2.xpose.msra.mxu0 0.0
        %929 = vmatprep.subr.mxu0 0.0
        %930 = vmatpush2.xpose.msra.mxu0 0.0
        %931 = vmatprep.subr.mxu0 0.0
        %932 = vmatpush2.xpose.msra.mxu0 0.0
        %933 = vmatprep.mubr.f32.mxu0 0.0
        %934 = vmatmul.mubr.f32.gmra.mxu0 %v864
        %v935 = vpop.f32.mrf.mxu0
        %v936 = vadd.f32 0.0, %v935
        %v937 = vpop.f32.mrf.mxu0
        %938 = vdwg.mxu0
        %v939 = vmul.f32 %v936, 0.17677669
        %v940 = vsel %vm862, %v939, -inf
        %941 = vmax.xlane.f32.xlu0 %v940
        %v942 = vpop.xlane.xlu0 %941
        %v943 = vsub.f32 %v939, %v942
        %v944 = vmul.f32 %v943, 1.442695
        %v945 = vpow.pop %v944
        %v946 = vsel %vm862, %v945, 0.0
        %947 = vadd.xlane.f32.xlu0 %v946
        %v948 = vpop.xlane.xlu0 %947
        %v949 = vrcp.pop %v948
        %v950 = vmul.f32 %v945, %v949
        %951 = vst.msk [vmem:[%s560] sm:$0xff] %vm862, %v950
        %v953 = vsel %vm862, %v950, 0
        %955 = vmatprep.subr.mxu0 0.0
        %956 = vmatpush1.msra.mxu0 0.0
        %957 = vmatprep.subr.mxu0 0.0
        %958 = vmatpush1.msra.mxu0 0.0
        %959 = vmatprep.subr.mxu0 0.0
        %960 = vmatpush1.msra.mxu0 0.0
        %961 = vmatprep.subr.mxu0 0.0
        %962 = vmatpush1.msra.mxu0 0.0
        %963 = vmatprep.subr.mxu0 0.0
        %964 = vmatpush1.msra.mxu0 0.0
        %965 = vmatprep.subr.mxu0 0.0
        %966 = vmatpush1.msra.mxu0 0.0
        %967 = vmatprep.subr.mxu0 0.0
        %968 = vmatpush1.msra.mxu0 0.0
        %969 = vmatprep.subr.mxu0 0.0
        %970 = vmatpush1.msra.mxu0 0.0
        %971 = vmatprep.subr.mxu0 0.0
        %972 = vmatpush1.msra.mxu0 0.0
        %973 = vmatprep.subr.mxu0 0.0
        %974 = vmatpush1.msra.mxu0 0.0
        %975 = vmatprep.subr.mxu0 0.0
        %976 = vmatpush1.msra.mxu0 0.0
        %977 = vmatprep.subr.mxu0 0.0
        %978 = vmatpush1.msra.mxu0 0.0
        %979 = vmatprep.subr.mxu0 0.0
        %980 = vmatpush1.msra.mxu0 0.0
        %981 = vmatprep.subr.mxu0 0.0
        %982 = vmatpush1.msra.mxu0 0.0
        %983 = vmatprep.subr.mxu0 0.0
        %984 = vmatpush1.msra.mxu0 0.0
        %985 = vmatprep.subr.mxu0 0.0
        %986 = vmatpush1.msra.mxu0 %v861
        %987 = vmatprep.subr.mxu0 0.0
        %988 = vmatpush2.msra.mxu0 0.0
        %989 = vmatprep.subr.mxu0 0.0
        %990 = vmatpush2.msra.mxu0 0.0
        %991 = vmatprep.subr.mxu0 0.0
        %992 = vmatpush2.msra.mxu0 0.0
        %993 = vmatprep.subr.mxu0 0.0
        %994 = vmatpush2.msra.mxu0 0.0
        %995 = vmatprep.subr.mxu0 0.0
        %996 = vmatpush2.msra.mxu0 0.0
        %997 = vmatprep.subr.mxu0 0.0
        %998 = vmatpush2.msra.mxu0 0.0
        %999 = vmatprep.subr.mxu0 0.0
        %1000 = vmatpush2.msra.mxu0 0.0
        %1001 = vmatprep.subr.mxu0 0.0
        %1002 = vmatpush2.msra.mxu0 0.0
        %1003 = vmatprep.subr.mxu0 0.0
        %1004 = vmatpush2.msra.mxu0 0.0
        %1005 = vmatprep.subr.mxu0 0.0
        %1006 = vmatpush2.msra.mxu0 0.0
        %1007 = vmatprep.subr.mxu0 0.0
        %1008 = vmatpush2.msra.mxu0 0.0
        %1009 = vmatprep.subr.mxu0 0.0
        %1010 = vmatpush2.msra.mxu0 0.0
        %1011 = vmatprep.subr.mxu0 0.0
        %1012 = vmatpush2.msra.mxu0 0.0
        %1013 = vmatprep.subr.mxu0 0.0
        %1014 = vmatpush2.msra.mxu0 0.0
        %1015 = vmatprep.subr.mxu0 0.0
        %1016 = vmatpush2.msra.mxu0 0.0
        %1017 = vmatprep.subr.mxu0 0.0
        %1018 = vmatpush2.msra.mxu0 0.0
        %1019 = vmatprep.mubr.f32.mxu0 0.0
        %1020 = vmatmul.mubr.f32.gmra.mxu0 %v953
        %v1021 = vpop.f32.mrf.mxu0
        %v1022 = vadd.f32 0.0, %v1021
        %v1023 = vpop.f32.mrf.mxu0
        %1024 = vdwg.mxu0
        %1025 = vrot.lane.b32.xlu0 %v857, 120
        %v1026 = vpop.permute.xlu0 %1025
        %1027 = vrot.lane.b32.xlu0 %v860, 120
        %v1028 = vpop.permute.xlu0 %1027
        %v1029 = vsel %vm862, %v1026, 0
        %v1031 = vsel %vm862, %v1028, 0
        %1033 = vmatprep.subr.mxu0 0.0
        %1034 = vmatpush1.xpose.msra.mxu0 0.0
        %1035 = vmatprep.subr.mxu0 0.0
        %1036 = vmatpush1.xpose.msra.mxu0 0.0
        %1037 = vmatprep.subr.mxu0 0.0
        %1038 = vmatpush1.xpose.msra.mxu0 0.0
        %1039 = vmatprep.subr.mxu0 0.0
        %1040 = vmatpush1.xpose.msra.mxu0 0.0
        %1041 = vmatprep.subr.mxu0 0.0
        %1042 = vmatpush1.xpose.msra.mxu0 0.0
        %1043 = vmatprep.subr.mxu0 0.0
        %1044 = vmatpush1.xpose.msra.mxu0 0.0
        %1045 = vmatprep.subr.mxu0 0.0
        %1046 = vmatpush1.xpose.msra.mxu0 0.0
        %1047 = vmatprep.subr.mxu0 0.0
        %1048 = vmatpush1.xpose.msra.mxu0 0.0
        %1049 = vmatprep.subr.mxu0 0.0
        %1050 = vmatpush1.xpose.msra.mxu0 0.0
        %1051 = vmatprep.subr.mxu0 0.0
        %1052 = vmatpush1.xpose.msra.mxu0 0.0
        %1053 = vmatprep.subr.mxu0 0.0
        %1054 = vmatpush1.xpose.msra.mxu0 0.0
        %1055 = vmatprep.subr.mxu0 0.0
        %1056 = vmatpush1.xpose.msra.mxu0 0.0
        %1057 = vmatprep.subr.mxu0 0.0
        %1058 = vmatpush1.xpose.msra.mxu0 0.0
        %1059 = vmatprep.subr.mxu0 0.0
        %1060 = vmatpush1.xpose.msra.mxu0 0.0
        %1061 = vmatprep.subr.mxu0 0.0
        %1062 = vmatpush1.xpose.msra.mxu0 0.0
        %1063 = vmatprep.subr.mxu0 0.0
        %1064 = vmatpush1.xpose.msra.mxu0 %v1031
        %1065 = vmatprep.subr.mxu0 0.0
        %1066 = vmatpush2.xpose.msra.mxu0 0.0
        %1067 = vmatprep.subr.mxu0 0.0
        %1068 = vmatpush2.xpose.msra.mxu0 0.0
        %1069 = vmatprep.subr.mxu0 0.0
        %1070 = vmatpush2.xpose.msra.mxu0 0.0
        %1071 = vmatprep.subr.mxu0 0.0
        %1072 = vmatpush2.xpose.msra.mxu0 0.0
        %1073 = vmatprep.subr.mxu0 0.0
        %1074 = vmatpush2.xpose.msra.mxu0 0.0
        %1075 = vmatprep.subr.mxu0 0.0
        %1076 = vmatpush2.xpose.msra.mxu0 0.0
        %1077 = vmatprep.subr.mxu0 0.0
        %1078 = vmatpush2.xpose.msra.mxu0 0.0
        %1079 = vmatprep.subr.mxu0 0.0
        %1080 = vmatpush2.xpose.msra.mxu0 0.0
        %1081 = vmatprep.subr.mxu0 0.0
        %1082 = vmatpush2.xpose.msra.mxu0 0.0
        %1083 = vmatprep.subr.mxu0 0.0
        %1084 = vmatpush2.xpose.msra.mxu0 0.0
        %1085 = vmatprep.subr.mxu0 0.0
        %1086 = vmatpush2.xpose.msra.mxu0 0.0
        %1087 = vmatprep.subr.mxu0 0.0
        %1088 = vmatpush2.xpose.msra.mxu0 0.0
        %1089 = vmatprep.subr.mxu0 0.0
        %1090 = vmatpush2.xpose.msra.mxu0 0.0
        %1091 = vmatprep.subr.mxu0 0.0
        %1092 = vmatpush2.xpose.msra.mxu0 0.0
        %1093 = vmatprep.subr.mxu0 0.0
        %1094 = vmatpush2.xpose.msra.mxu0 0.0
        %1095 = vmatprep.subr.mxu0 0.0
        %1096 = vmatpush2.xpose.msra.mxu0 0.0
        %1097 = vmatprep.mubr.f32.mxu0 0.0
        %1098 = vmatmul.mubr.f32.gmra.mxu0 %v1029
        %v1099 = vpop.f32.mrf.mxu0
        %v1100 = vadd.f32 0.0, %v1099
        %v1101 = vpop.f32.mrf.mxu0
        %1102 = vdwg.mxu0
        %v1103 = vmul.f32 %v1100, 0.17677669
        %v1104 = vsel %vm862, %v1103, -inf
        %1105 = vmax.xlane.f32.xlu0 %v1104
        %v1106 = vpop.xlane.xlu0 %1105
        %v1107 = vsub.f32 %v1103, %v1106
        %v1108 = vmul.f32 %v1107, 1.442695
        %v1109 = vpow.pop %v1108
        %v1110 = vsel %vm862, %v1109, 0.0
        %1111 = vadd.xlane.f32.xlu0 %v1110
        %v1112 = vpop.xlane.xlu0 %1111
        %v1113 = vrcp.pop %v1112
        %v1114 = vmul.f32 %v1109, %v1113
        %s1115 = scalar_lea.vmem %s560, 8 [#allocation17]
        %1116 = vst.msk [vmem:[%s1115] sm:$0xff] %vm862, %v1114
        %1118 = vrot.lane.b32.xlu0 %v861, 120
        %v1119 = vpop.permute.xlu0 %1118
        %v1122 = vsel %vm862, %v1114, 0
        %1124 = vmatprep.subr.mxu0 0.0
        %1125 = vmatpush1.msra.mxu0 0.0
        %1126 = vmatprep.subr.mxu0 0.0
        %1127 = vmatpush1.msra.mxu0 0.0
        %1128 = vmatprep.subr.mxu0 0.0
        %1129 = vmatpush1.msra.mxu0 0.0
        %1130 = vmatprep.subr.mxu0 0.0
        %1131 = vmatpush1.msra.mxu0 0.0
        %1132 = vmatprep.subr.mxu0 0.0
        %1133 = vmatpush1.msra.mxu0 0.0
        %1134 = vmatprep.subr.mxu0 0.0
        %1135 = vmatpush1.msra.mxu0 0.0
        %1136 = vmatprep.subr.mxu0 0.0
        %1137 = vmatpush1.msra.mxu0 0.0
        %1138 = vmatprep.subr.mxu0 0.0
        %1139 = vmatpush1.msra.mxu0 0.0
        %1140 = vmatprep.subr.mxu0 0.0
        %1141 = vmatpush1.msra.mxu0 0.0
        %1142 = vmatprep.subr.mxu0 0.0
        %1143 = vmatpush1.msra.mxu0 0.0
        %1144 = vmatprep.subr.mxu0 0.0
        %1145 = vmatpush1.msra.mxu0 0.0
        %1146 = vmatprep.subr.mxu0 0.0
        %1147 = vmatpush1.msra.mxu0 0.0
        %1148 = vmatprep.subr.mxu0 0.0
        %1149 = vmatpush1.msra.mxu0 0.0
        %1150 = vmatprep.subr.mxu0 0.0
        %1151 = vmatpush1.msra.mxu0 0.0
        %1152 = vmatprep.subr.mxu0 0.0
        %1153 = vmatpush1.msra.mxu0 0.0
        %1154 = vmatprep.subr.mxu0 0.0
        %1155 = vmatpush1.msra.mxu0 %v1119
        %1156 = vmatprep.subr.mxu0 0.0
        %1157 = vmatpush2.msra.mxu0 0.0
        %1158 = vmatprep.subr.mxu0 0.0
        %1159 = vmatpush2.msra.mxu0 0.0
        %1160 = vmatprep.subr.mxu0 0.0
        %1161 = vmatpush2.msra.mxu0 0.0
        %1162 = vmatprep.subr.mxu0 0.0
        %1163 = vmatpush2.msra.mxu0 0.0
        %1164 = vmatprep.subr.mxu0 0.0
        %1165 = vmatpush2.msra.mxu0 0.0
        %1166 = vmatprep.subr.mxu0 0.0
        %1167 = vmatpush2.msra.mxu0 0.0
        %1168 = vmatprep.subr.mxu0 0.0
        %1169 = vmatpush2.msra.mxu0 0.0
        %1170 = vmatprep.subr.mxu0 0.0
        %1171 = vmatpush2.msra.mxu0 0.0
        %1172 = vmatprep.subr.mxu0 0.0
        %1173 = vmatpush2.msra.mxu0 0.0
        %1174 = vmatprep.subr.mxu0 0.0
        %1175 = vmatpush2.msra.mxu0 0.0
        %1176 = vmatprep.subr.mxu0 0.0
        %1177 = vmatpush2.msra.mxu0 0.0
        %1178 = vmatprep.subr.mxu0 0.0
        %1179 = vmatpush2.msra.mxu0 0.0
        %1180 = vmatprep.subr.mxu0 0.0
        %1181 = vmatpush2.msra.mxu0 0.0
        %1182 = vmatprep.subr.mxu0 0.0
        %1183 = vmatpush2.msra.mxu0 0.0
        %1184 = vmatprep.subr.mxu0 0.0
        %1185 = vmatpush2.msra.mxu0 0.0
        %1186 = vmatprep.subr.mxu0 0.0
        %1187 = vmatpush2.msra.mxu0 0.0
        %1188 = vmatprep.mubr.f32.mxu0 0.0
        %1189 = vmatmul.mubr.f32.gmra.mxu0 %v1122
        %v1190 = vpop.f32.mrf.mxu0
        %v1191 = vadd.f32 0.0, %v1190
        %v1192 = vpop.f32.mrf.mxu0
        %1193 = vdwg.mxu0
        %1194 = vrot.lane.b32.xlu0 %v857, 112
        %v1195 = vpop.permute.xlu0 %1194
        %1196 = vrot.lane.b32.xlu0 %v860, 112
        %v1197 = vpop.permute.xlu0 %1196
        %v1198 = vsel %vm862, %v1195, 0
        %v1200 = vsel %vm862, %v1197, 0
        %1202 = vmatprep.subr.mxu0 0.0
        %1203 = vmatpush1.xpose.msra.mxu0 0.0
        %1204 = vmatprep.subr.mxu0 0.0
        %1205 = vmatpush1.xpose.msra.mxu0 0.0
        %1206 = vmatprep.subr.mxu0 0.0
        %1207 = vmatpush1.xpose.msra.mxu0 0.0
        %1208 = vmatprep.subr.mxu0 0.0
        %1209 = vmatpush1.xpose.msra.mxu0 0.0
        %1210 = vmatprep.subr.mxu0 0.0
        %1211 = vmatpush1.xpose.msra.mxu0 0.0
        %1212 = vmatprep.subr.mxu0 0.0
        %1213 = vmatpush1.xpose.msra.mxu0 0.0
        %1214 = vmatprep.subr.mxu0 0.0
        %1215 = vmatpush1.xpose.msra.mxu0 0.0
        %1216 = vmatprep.subr.mxu0 0.0
        %1217 = vmatpush1.xpose.msra.mxu0 0.0
        %1218 = vmatprep.subr.mxu0 0.0
        %1219 = vmatpush1.xpose.msra.mxu0 0.0
        %1220 = vmatprep.subr.mxu0 0.0
        %1221 = vmatpush1.xpose.msra.mxu0 0.0
        %1222 = vmatprep.subr.mxu0 0.0
        %1223 = vmatpush1.xpose.msra.mxu0 0.0
        %1224 = vmatprep.subr.mxu0 0.0
        %1225 = vmatpush1.xpose.msra.mxu0 0.0
        %1226 = vmatprep.subr.mxu0 0.0
        %1227 = vmatpush1.xpose.msra.mxu0 0.0
        %1228 = vmatprep.subr.mxu0 0.0
        %1229 = vmatpush1.xpose.msra.mxu0 0.0
        %1230 = vmatprep.subr.mxu0 0.0
        %1231 = vmatpush1.xpose.msra.mxu0 0.0
        %1232 = vmatprep.subr.mxu0 0.0
        %1233 = vmatpush1.xpose.msra.mxu0 %v1200
        %1234 = vmatprep.subr.mxu0 0.0
        %1235 = vmatpush2.xpose.msra.mxu0 0.0
        %1236 = vmatprep.subr.mxu0 0.0
        %1237 = vmatpush2.xpose.msra.mxu0 0.0
        %1238 = vmatprep.subr.mxu0 0.0
        %1239 = vmatpush2.xpose.msra.mxu0 0.0
        %1240 = vmatprep.subr.mxu0 0.0
        %1241 = vmatpush2.xpose.msra.mxu0 0.0
        %1242 = vmatprep.subr.mxu0 0.0
        %1243 = vmatpush2.xpose.msra.mxu0 0.0
        %1244 = vmatprep.subr.mxu0 0.0
        %1245 = vmatpush2.xpose.msra.mxu0 0.0
        %1246 = vmatprep.subr.mxu0 0.0
        %1247 = vmatpush2.xpose.msra.mxu0 0.0
        %1248 = vmatprep.subr.mxu0 0.0
        %1249 = vmatpush2.xpose.msra.mxu0 0.0
        %1250 = vmatprep.subr.mxu0 0.0
        %1251 = vmatpush2.xpose.msra.mxu0 0.0
        %1252 = vmatprep.subr.mxu0 0.0
        %1253 = vmatpush2.xpose.msra.mxu0 0.0
        %1254 = vmatprep.subr.mxu0 0.0
        %1255 = vmatpush2.xpose.msra.mxu0 0.0
        %1256 = vmatprep.subr.mxu0 0.0
        %1257 = vmatpush2.xpose.msra.mxu0 0.0
        %1258 = vmatprep.subr.mxu0 0.0
        %1259 = vmatpush2.xpose.msra.mxu0 0.0
        %1260 = vmatprep.subr.mxu0 0.0
        %1261 = vmatpush2.xpose.msra.mxu0 0.0
        %1262 = vmatprep.subr.mxu0 0.0
        %1263 = vmatpush2.xpose.msra.mxu0 0.0
        %1264 = vmatprep.subr.mxu0 0.0
        %1265 = vmatpush2.xpose.msra.mxu0 0.0
        %1266 = vmatprep.mubr.f32.mxu0 0.0
        %1267 = vmatmul.mubr.f32.gmra.mxu0 %v1198
        %v1268 = vpop.f32.mrf.mxu0
        %v1269 = vadd.f32 0.0, %v1268
        %v1270 = vpop.f32.mrf.mxu0
        %1271 = vdwg.mxu0
        %v1272 = vmul.f32 %v1269, 0.17677669
        %v1273 = vsel %vm862, %v1272, -inf
        %1274 = vmax.xlane.f32.xlu0 %v1273
        %v1275 = vpop.xlane.xlu0 %1274
        %v1276 = vsub.f32 %v1272, %v1275
        %v1277 = vmul.f32 %v1276, 1.442695
        %v1278 = vpow.pop %v1277
        %v1279 = vsel %vm862, %v1278, 0.0
        %1280 = vadd.xlane.f32.xlu0 %v1279
        %v1281 = vpop.xlane.xlu0 %1280
        %v1282 = vrcp.pop %v1281
        %v1283 = vmul.f32 %v1278, %v1282
        %s1284 = scalar_lea.vmem %s560, 16 [#allocation17]
        %1285 = vst.msk [vmem:[%s1284] sm:$0xff] %vm862, %v1283
        %1286 = vrot.lane.b32.xlu0 %v861, 112
        %v1287 = vpop.permute.xlu0 %1286
        %v1290 = vsel %vm862, %v1283, 0
        %1292 = vmatprep.subr.mxu0 0.0
        %1293 = vmatpush1.msra.mxu0 0.0
        %1294 = vmatprep.subr.mxu0 0.0
        %1295 = vmatpush1.msra.mxu0 0.0
        %1296 = vmatprep.subr.mxu0 0.0
        %1297 = vmatpush1.msra.mxu0 0.0
        %1298 = vmatprep.subr.mxu0 0.0
        %1299 = vmatpush1.msra.mxu0 0.0
        %1300 = vmatprep.subr.mxu0 0.0
        %1301 = vmatpush1.msra.mxu0 0.0
        %1302 = vmatprep.subr.mxu0 0.0
        %1303 = vmatpush1.msra.mxu0 0.0
        %1304 = vmatprep.subr.mxu0 0.0
        %1305 = vmatpush1.msra.mxu0 0.0
        %1306 = vmatprep.subr.mxu0 0.0
        %1307 = vmatpush1.msra.mxu0 0.0
        %1308 = vmatprep.subr.mxu0 0.0
        %1309 = vmatpush1.msra.mxu0 0.0
        %1310 = vmatprep.subr.mxu0 0.0
        %1311 = vmatpush1.msra.mxu0 0.0
        %1312 = vmatprep.subr.mxu0 0.0
        %1313 = vmatpush1.msra.mxu0 0.0
        %1314 = vmatprep.subr.mxu0 0.0
        %1315 = vmatpush1.msra.mxu0 0.0
        %1316 = vmatprep.subr.mxu0 0.0
        %1317 = vmatpush1.msra.mxu0 0.0
        %1318 = vmatprep.subr.mxu0 0.0
        %1319 = vmatpush1.msra.mxu0 0.0
        %1320 = vmatprep.subr.mxu0 0.0
        %1321 = vmatpush1.msra.mxu0 0.0
        %1322 = vmatprep.subr.mxu0 0.0
        %1323 = vmatpush1.msra.mxu0 %v1287
        %1324 = vmatprep.subr.mxu0 0.0
        %1325 = vmatpush2.msra.mxu0 0.0
        %1326 = vmatprep.subr.mxu0 0.0
        %1327 = vmatpush2.msra.mxu0 0.0
        %1328 = vmatprep.subr.mxu0 0.0
        %1329 = vmatpush2.msra.mxu0 0.0
        %1330 = vmatprep.subr.mxu0 0.0
        %1331 = vmatpush2.msra.mxu0 0.0
        %1332 = vmatprep.subr.mxu0 0.0
        %1333 = vmatpush2.msra.mxu0 0.0
        %1334 = vmatprep.subr.mxu0 0.0
        %1335 = vmatpush2.msra.mxu0 0.0
        %1336 = vmatprep.subr.mxu0 0.0
        %1337 = vmatpush2.msra.mxu0 0.0
        %1338 = vmatprep.subr.mxu0 0.0
        %1339 = vmatpush2.msra.mxu0 0.0
        %1340 = vmatprep.subr.mxu0 0.0
        %1341 = vmatpush2.msra.mxu0 0.0
        %1342 = vmatprep.subr.mxu0 0.0
        %1343 = vmatpush2.msra.mxu0 0.0
        %1344 = vmatprep.subr.mxu0 0.0
        %1345 = vmatpush2.msra.mxu0 0.0
        %1346 = vmatprep.subr.mxu0 0.0
        %1347 = vmatpush2.msra.mxu0 0.0
        %1348 = vmatprep.subr.mxu0 0.0
        %1349 = vmatpush2.msra.mxu0 0.0
        %1350 = vmatprep.subr.mxu0 0.0
        %1351 = vmatpush2.msra.mxu0 0.0
        %1352 = vmatprep.subr.mxu0 0.0
        %1353 = vmatpush2.msra.mxu0 0.0
        %1354 = vmatprep.subr.mxu0 0.0
        %1355 = vmatpush2.msra.mxu0 0.0
        %1356 = vmatprep.mubr.f32.mxu0 0.0
        %1357 = vmatmul.mubr.f32.gmra.mxu0 %v1290
        %v1358 = vpop.f32.mrf.mxu0
        %v1359 = vadd.f32 0.0, %v1358
        %v1360 = vpop.f32.mrf.mxu0
        %1361 = vdwg.mxu0
        %1362 = vrot.lane.b32.xlu0 %v857, 104
        %v1363 = vpop.permute.xlu0 %1362
        %1364 = vrot.lane.b32.xlu0 %v860, 104
        %v1365 = vpop.permute.xlu0 %1364
        %v1366 = vsel %vm862, %v1363, 0
        %v1368 = vsel %vm862, %v1365, 0
        %1370 = vmatprep.subr.mxu0 0.0
        %1371 = vmatpush1.xpose.msra.mxu0 0.0
        %1372 = vmatprep.subr.mxu0 0.0
        %1373 = vmatpush1.xpose.msra.mxu0 0.0
        %1374 = vmatprep.subr.mxu0 0.0
        %1375 = vmatpush1.xpose.msra.mxu0 0.0
        %1376 = vmatprep.subr.mxu0 0.0
        %1377 = vmatpush1.xpose.msra.mxu0 0.0
        %1378 = vmatprep.subr.mxu0 0.0
        %1379 = vmatpush1.xpose.msra.mxu0 0.0
        %1380 = vmatprep.subr.mxu0 0.0
        %1381 = vmatpush1.xpose.msra.mxu0 0.0
        %1382 = vmatprep.subr.mxu0 0.0
        %1383 = vmatpush1.xpose.msra.mxu0 0.0
        %1384 = vmatprep.subr.mxu0 0.0
        %1385 = vmatpush1.xpose.msra.mxu0 0.0
        %1386 = vmatprep.subr.mxu0 0.0
        %1387 = vmatpush1.xpose.msra.mxu0 0.0
        %1388 = vmatprep.subr.mxu0 0.0
        %1389 = vmatpush1.xpose.msra.mxu0 0.0
        %1390 = vmatprep.subr.mxu0 0.0
        %1391 = vmatpush1.xpose.msra.mxu0 0.0
        %1392 = vmatprep.subr.mxu0 0.0
        %1393 = vmatpush1.xpose.msra.mxu0 0.0
        %1394 = vmatprep.subr.mxu0 0.0
        %1395 = vmatpush1.xpose.msra.mxu0 0.0
        %1396 = vmatprep.subr.mxu0 0.0
        %1397 = vmatpush1.xpose.msra.mxu0 0.0
        %1398 = vmatprep.subr.mxu0 0.0
        %1399 = vmatpush1.xpose.msra.mxu0 0.0
        %1400 = vmatprep.subr.mxu0 0.0
        %1401 = vmatpush1.xpose.msra.mxu0 %v1368
        %1402 = vmatprep.subr.mxu0 0.0
        %1403 = vmatpush2.xpose.msra.mxu0 0.0
        %1404 = vmatprep.subr.mxu0 0.0
        %1405 = vmatpush2.xpose.msra.mxu0 0.0
        %1406 = vmatprep.subr.mxu0 0.0
        %1407 = vmatpush2.xpose.msra.mxu0 0.0
        %1408 = vmatprep.subr.mxu0 0.0
        %1409 = vmatpush2.xpose.msra.mxu0 0.0
        %1410 = vmatprep.subr.mxu0 0.0
        %1411 = vmatpush2.xpose.msra.mxu0 0.0
        %1412 = vmatprep.subr.mxu0 0.0
        %1413 = vmatpush2.xpose.msra.mxu0 0.0
        %1414 = vmatprep.subr.mxu0 0.0
        %1415 = vmatpush2.xpose.msra.mxu0 0.0
        %1416 = vmatprep.subr.mxu0 0.0
        %1417 = vmatpush2.xpose.msra.mxu0 0.0
        %1418 = vmatprep.subr.mxu0 0.0
        %1419 = vmatpush2.xpose.msra.mxu0 0.0
        %1420 = vmatprep.subr.mxu0 0.0
        %1421 = vmatpush2.xpose.msra.mxu0 0.0
        %1422 = vmatprep.subr.mxu0 0.0
        %1423 = vmatpush2.xpose.msra.mxu0 0.0
        %1424 = vmatprep.subr.mxu0 0.0
        %1425 = vmatpush2.xpose.msra.mxu0 0.0
        %1426 = vmatprep.subr.mxu0 0.0
        %1427 = vmatpush2.xpose.msra.mxu0 0.0
        %1428 = vmatprep.subr.mxu0 0.0
        %1429 = vmatpush2.xpose.msra.mxu0 0.0
        %1430 = vmatprep.subr.mxu0 0.0
        %1431 = vmatpush2.xpose.msra.mxu0 0.0
        %1432 = vmatprep.subr.mxu0 0.0
        %1433 = vmatpush2.xpose.msra.mxu0 0.0
        %1434 = vmatprep.mubr.f32.mxu0 0.0
        %1435 = vmatmul.mubr.f32.gmra.mxu0 %v1366
        %v1436 = vpop.f32.mrf.mxu0
        %v1437 = vadd.f32 0.0, %v1436
        %v1438 = vpop.f32.mrf.mxu0
        %1439 = vdwg.mxu0
        %v1440 = vmul.f32 %v1437, 0.17677669
        %v1441 = vsel %vm862, %v1440, -inf
        %1442 = vmax.xlane.f32.xlu0 %v1441
        %v1443 = vpop.xlane.xlu0 %1442
        %v1444 = vsub.f32 %v1440, %v1443
        %v1445 = vmul.f32 %v1444, 1.442695
        %v1446 = vpow.pop %v1445
        %v1447 = vsel %vm862, %v1446, 0.0
        %1448 = vadd.xlane.f32.xlu0 %v1447
        %v1449 = vpop.xlane.xlu0 %1448
        %v1450 = vrcp.pop %v1449
        %v1451 = vmul.f32 %v1446, %v1450
        %s1452 = scalar_lea.vmem %s560, 24 [#allocation17]
        %1453 = vst.msk [vmem:[%s1452] sm:$0xff] %vm862, %v1451
        %1454 = vrot.lane.b32.xlu0 %v861, 104
        %v1455 = vpop.permute.xlu0 %1454
        %v1458 = vsel %vm862, %v1451, 0
        %1460 = vmatprep.subr.mxu0 0.0
        %1461 = vmatpush1.msra.mxu0 0.0
        %1462 = vmatprep.subr.mxu0 0.0
        %1463 = vmatpush1.msra.mxu0 0.0
        %1464 = vmatprep.subr.mxu0 0.0
        %1465 = vmatpush1.msra.mxu0 0.0
        %1466 = vmatprep.subr.mxu0 0.0
        %1467 = vmatpush1.msra.mxu0 0.0
        %1468 = vmatprep.subr.mxu0 0.0
        %1469 = vmatpush1.msra.mxu0 0.0
        %1470 = vmatprep.subr.mxu0 0.0
        %1471 = vmatpush1.msra.mxu0 0.0
        %1472 = vmatprep.subr.mxu0 0.0
        %1473 = vmatpush1.msra.mxu0 0.0
        %1474 = vmatprep.subr.mxu0 0.0
        %1475 = vmatpush1.msra.mxu0 0.0
        %1476 = vmatprep.subr.mxu0 0.0
        %1477 = vmatpush1.msra.mxu0 0.0
        %1478 = vmatprep.subr.mxu0 0.0
        %1479 = vmatpush1.msra.mxu0 0.0
        %1480 = vmatprep.subr.mxu0 0.0
        %1481 = vmatpush1.msra.mxu0 0.0
        %1482 = vmatprep.subr.mxu0 0.0
        %1483 = vmatpush1.msra.mxu0 0.0
        %1484 = vmatprep.subr.mxu0 0.0
        %1485 = vmatpush1.msra.mxu0 0.0
        %1486 = vmatprep.subr.mxu0 0.0
        %1487 = vmatpush1.msra.mxu0 0.0
        %1488 = vmatprep.subr.mxu0 0.0
        %1489 = vmatpush1.msra.mxu0 0.0
        %1490 = vmatprep.subr.mxu0 0.0
        %1491 = vmatpush1.msra.mxu0 %v1455
        %1492 = vmatprep.subr.mxu0 0.0
        %1493 = vmatpush2.msra.mxu0 0.0
        %1494 = vmatprep.subr.mxu0 0.0
        %1495 = vmatpush2.msra.mxu0 0.0
        %1496 = vmatprep.subr.mxu0 0.0
        %1497 = vmatpush2.msra.mxu0 0.0
        %1498 = vmatprep.subr.mxu0 0.0
        %1499 = vmatpush2.msra.mxu0 0.0
        %1500 = vmatprep.subr.mxu0 0.0
        %1501 = vmatpush2.msra.mxu0 0.0
        %1502 = vmatprep.subr.mxu0 0.0
        %1503 = vmatpush2.msra.mxu0 0.0
        %1504 = vmatprep.subr.mxu0 0.0
        %1505 = vmatpush2.msra.mxu0 0.0
        %1506 = vmatprep.subr.mxu0 0.0
        %1507 = vmatpush2.msra.mxu0 0.0
        %1508 = vmatprep.subr.mxu0 0.0
        %1509 = vmatpush2.msra.mxu0 0.0
        %1510 = vmatprep.subr.mxu0 0.0
        %1511 = vmatpush2.msra.mxu0 0.0
        %1512 = vmatprep.subr.mxu0 0.0
        %1513 = vmatpush2.msra.mxu0 0.0
        %1514 = vmatprep.subr.mxu0 0.0
        %1515 = vmatpush2.msra.mxu0 0.0
        %1516 = vmatprep.subr.mxu0 0.0
        %1517 = vmatpush2.msra.mxu0 0.0
        %1518 = vmatprep.subr.mxu0 0.0
        %1519 = vmatpush2.msra.mxu0 0.0
        %1520 = vmatprep.subr.mxu0 0.0
        %1521 = vmatpush2.msra.mxu0 0.0
        %1522 = vmatprep.subr.mxu0 0.0
        %1523 = vmatpush2.msra.mxu0 0.0
        %1524 = vmatprep.mubr.f32.mxu0 0.0
        %1525 = vmatmul.mubr.f32.gmra.mxu0 %v1458
        %v1526 = vpop.f32.mrf.mxu0
        %v1527 = vadd.f32 0.0, %v1526
        %v1528 = vpop.f32.mrf.mxu0
        %1529 = vdwg.mxu0
        %1531 = vrot.lane.b32.xlu0 %v1191, 8
        %v1532 = vpop.permute.xlu0 %1531
        %1535 = vrot.lane.b32.xlu0 %v1359, 16
        %v1536 = vpop.permute.xlu0 %1535
        %1539 = vrot.lane.b32.xlu0 %v1527, 24
        %v1540 = vpop.permute.xlu0 %1539
        %v1542 = vsel %vm862, %v1022, %v1532
        %vm1543 = vcmask 130048
        %v1544 = vsel %vm1543, %v1542, %v1536
        %vm1545 = vcmask 195584
        %v1546 = vsel %vm1545, %v1544, %v1540
        %v1547 = vld [vmem:[#allocation15] sm:$0xff]
        %v1548 = vld [vmem:[#allocation15 + $0x8] sm:$0xff]
        %v1549 = vld [vmem:[#allocation15 + $0x10] sm:$0xff]
        %v1550 = vld [vmem:[#allocation15 + $0x18] sm:$0xff]
        %v1552 = vsel %vm774, %v1546, 0
        %v1555 = vsel %vm774, %v1547, 0
        %v1558 = vsel %vm774, %v1548, 0
        %v1561 = vsel %vm774, %v1549, 0
        %v1564 = vsel %vm774, %v1550, 0
        %1566 = vmatprep.subr.mxu0 0.0
        %1567 = vmatpush1.xpose.msra.mxu0 0.0
        %1568 = vmatprep.subr.mxu0 0.0
        %1569 = vmatpush1.xpose.msra.mxu0 0.0
        %1570 = vmatprep.subr.mxu0 0.0
        %1571 = vmatpush1.xpose.msra.mxu0 0.0
        %1572 = vmatprep.subr.mxu0 0.0
        %1573 = vmatpush1.xpose.msra.mxu0 0.0
        %1574 = vmatprep.subr.mxu0 0.0
        %1575 = vmatpush1.xpose.msra.mxu0 0.0
        %1576 = vmatprep.subr.mxu0 0.0
        %1577 = vmatpush1.xpose.msra.mxu0 0.0
        %1578 = vmatprep.subr.mxu0 0.0
        %1579 = vmatpush1.xpose.msra.mxu0 0.0
        %1580 = vmatprep.subr.mxu0 0.0
        %1581 = vmatpush1.xpose.msra.mxu0 0.0
        %1582 = vmatprep.subr.mxu0 0.0
        %1583 = vmatpush1.xpose.msra.mxu0 0.0
        %1584 = vmatprep.subr.mxu0 0.0
        %1585 = vmatpush1.xpose.msra.mxu0 0.0
        %1586 = vmatprep.subr.mxu0 0.0
        %1587 = vmatpush1.xpose.msra.mxu0 0.0
        %1588 = vmatprep.subr.mxu0 0.0
        %1589 = vmatpush1.xpose.msra.mxu0 0.0
        %1590 = vmatprep.subr.mxu0 0.0
        %1591 = vmatpush1.xpose.msra.mxu0 %v1564
        %1592 = vmatprep.subr.mxu0 0.0
        %1593 = vmatpush1.xpose.msra.mxu0 %v1561
        %1594 = vmatprep.subr.mxu0 0.0
        %1595 = vmatpush1.xpose.msra.mxu0 %v1558
        %1596 = vmatprep.subr.mxu0 0.0
        %1597 = vmatpush1.xpose.msra.mxu0 %v1555
        %1598 = vmatprep.subr.mxu0 0.0
        %1599 = vmatpush2.xpose.msra.mxu0 0.0
        %1600 = vmatprep.subr.mxu0 0.0
        %1601 = vmatpush2.xpose.msra.mxu0 0.0
        %1602 = vmatprep.subr.mxu0 0.0
        %1603 = vmatpush2.xpose.msra.mxu0 0.0
        %1604 = vmatprep.subr.mxu0 0.0
        %1605 = vmatpush2.xpose.msra.mxu0 0.0
        %1606 = vmatprep.subr.mxu0 0.0
        %1607 = vmatpush2.xpose.msra.mxu0 0.0
        %1608 = vmatprep.subr.mxu0 0.0
        %1609 = vmatpush2.xpose.msra.mxu0 0.0
        %1610 = vmatprep.subr.mxu0 0.0
        %1611 = vmatpush2.xpose.msra.mxu0 0.0
        %1612 = vmatprep.subr.mxu0 0.0
        %1613 = vmatpush2.xpose.msra.mxu0 0.0
        %1614 = vmatprep.subr.mxu0 0.0
        %1615 = vmatpush2.xpose.msra.mxu0 0.0
        %1616 = vmatprep.subr.mxu0 0.0
        %1617 = vmatpush2.xpose.msra.mxu0 0.0
        %1618 = vmatprep.subr.mxu0 0.0
        %1619 = vmatpush2.xpose.msra.mxu0 0.0
        %1620 = vmatprep.subr.mxu0 0.0
        %1621 = vmatpush2.xpose.msra.mxu0 0.0
        %1622 = vmatprep.subr.mxu0 0.0
        %1623 = vmatpush2.xpose.msra.mxu0 0.0
        %1624 = vmatprep.subr.mxu0 0.0
        %1625 = vmatpush2.xpose.msra.mxu0 0.0
        %1626 = vmatprep.subr.mxu0 0.0
        %1627 = vmatpush2.xpose.msra.mxu0 0.0
        %1628 = vmatprep.subr.mxu0 0.0
        %1629 = vmatpush2.xpose.msra.mxu0 0.0
        %1630 = vmatprep.mubr.f32.mxu0 0.0
        %1631 = vmatmul.mubr.f32.gmra.mxu0 %v1552
        %v1632 = vpop.f32.mrf.mxu0
        %v1633 = vadd.f32 0.0, %v1632
        %v1634 = vpop.f32.mrf.mxu0
        %1635 = vdwg.mxu0
        %1636 = vst.msk [vmem:[%s553] sm:$0xff] %vm774, %v1633
        %s1637 = sand.u32 %s286, 1
        %s1638 = scalar_lea.sflag [#allocation6], %s1637
        %s1639 = sand.u32 %s286, 1
        %s1640 = smul.addr %s1639, 8
        %s1641 = scalar_lea.vmem [#allocation16], %s1640
        %s1642 = sand.u32 %s314, 1
        %s1643 = scalar_lea.sflag [#allocation18], %s1642
        %s1644 = sand.u32 %s314, 1
        %s1645 = smul.addr %s1644, 32
        %s1646 = scalar_lea.vmem [#allocation17], %s1645
        // Predicated region
        $region93: #{tpu_custom_call.1} parent=59 // pred_check
          %p1647 = pneg %p296
        $region94: #{tpu_custom_call.1} parent=59 // pred_check_branch
          %1649 = sbr.rel (%p1647) target = $region96
        $region95: #{tpu_custom_call.1} parent=59 // pred_region
          %s1651 = ssub.s32 128, 128
          %1652 = vsyncadd %s1638, %s1651
          %s1653 = sadd.s32 %s42, %s41
          %s1654 = smul.addr %s1653, 128
          %s1655 = scalar_lea.hbm %s10, %s1654
          %s1657 = sshll.u32 %s1641, 4
          %s1658 = int_to_ptr.vmem [resolvable:$true] %s1657
          %1660 = dma.vmem_to_hbm [thread:$0]  %s1658, 128, %s1655, %s1638
        $region96: #{tpu_custom_call.1} parent=59 // pred_fallthru
          _
        // Predicated region
        $region97: #{tpu_custom_call.1} parent=59 // pred_check
          %p1661 = pneg %p324
        $region98: #{tpu_custom_call.1} parent=59 // pred_check_branch
          %1663 = sbr.rel (%p1661) target = $region100
        $region99: #{tpu_custom_call.1} parent=59 // pred_region
          %s1665 = ssub.s32 512, 512
          %1666 = vsyncadd %s1643, %s1665
          %s1667 = sadd.s32 %s42, %s41
          %s1668 = smul.addr %s1667, 128
          %s1669 = scalar_lea.hbm %s11, %s1668
          %s1670 = sshll.u32 %s1646, 4
          %s1671 = int_to_ptr.vmem [resolvable:$true] %s1670
          %1676 = dma.vmem_to_hbm [thread:$0]  %s1671, 512, %s1669, %s1643, 128, 256, 8
        $region100: #{tpu_custom_call.1} parent=59 // pred_fallthru
          _
      $region60: #{tpu_custom_call.1} parent=5 // pred_fallthru
        _
      %p1677 = scmp.le.s32.totalorder 2, %s32
      // Predicated region
      $region101: #{tpu_custom_call.1} parent=5 // pred_check
        %p1678 = pneg %p1677
      $region102: #{tpu_custom_call.1} parent=5 // pred_check_branch
        %1680 = sbr.rel (%p1678) target = $region104
      $region103: #{tpu_custom_call.1} parent=5 // pred_region
        %s1681 = ssub.s32 %s32, 2
        // Predicated region
        $region105: #{tpu_custom_call.1} parent=103 // pred_check
          %p1682 = pneg %p302
        $region106: #{tpu_custom_call.1} parent=103 // pred_check_branch
          %1684 = sbr.rel (%p1682) target = $region108
        $region107: #{tpu_custom_call.1} parent=103 // pred_region
          %s1685 = sand.u32 %s287, 1
          %s1686 = scalar_lea.sflag [#allocation6], %s1685
          %s1687 = sand.u32 %s287, 1
          %s1688 = smul.addr %s1687, 8
          %s1689 = scalar_lea.vmem [#allocation16], %s1688
          %1690 = dma.done %s1686, 128
        $region108: #{tpu_custom_call.1} parent=103 // pred_fallthru
          _
        // Predicated region
        $region109: #{tpu_custom_call.1} parent=103 // pred_check
          %p1691 = pneg %p330
        $region110: #{tpu_custom_call.1} parent=103 // pred_check_branch
          %1693 = sbr.rel (%p1691) target = $region112
        $region111: #{tpu_custom_call.1} parent=103 // pred_region
          %s1694 = sand.u32 %s315, 1
          %s1695 = scalar_lea.sflag [#allocation18], %s1694
          %s1696 = sand.u32 %s315, 1
          %s1697 = smul.addr %s1696, 32
          %s1698 = scalar_lea.vmem [#allocation17], %s1697
          %1699 = dma.done %s1695, 512
        $region112: #{tpu_custom_call.1} parent=103 // pred_fallthru
          _
      $region104: #{tpu_custom_call.1} parent=5 // pred_fallthru
        _
    $region6: #{tpu_custom_call.1} parent=1 // loop_footer
      %s36 = sadd.s32 1, %s32
    $region7: #{tpu_custom_call.1} parent=1 // loop_footer_branch
      %31 = sbr.rel target = $region3
    $region8: #{tpu_custom_call.1} parent=1 // loop_exit
      _
    %1700 = vsyncpa [#allocation5], 1
    %s1701 = scalar_lea.sflag [#allocation5], 1
    %1702 = vsyncpa %s1701, 1
    %1703 = vsyncpa [#allocation8], 1
    %s1704 = scalar_lea.sflag [#allocation8], 1
    %1705 = vsyncpa %s1704, 1
    %1706 = vsyncpa [#allocation11], 1
    %1707 = vsyncpa [#allocation14], 1
    %1708 = vsyncpa [#allocation6], 1
    %s1709 = scalar_lea.sflag [#allocation6], 1
    %1710 = vsyncpa %s1709, 1
    %1711 = vsyncpa [#allocation18], 1
    %s1712 = scalar_lea.sflag [#allocation18], 1
    %1713 = vsyncpa %s1712, 1

</llo_original>
